<compile_context>
chip_gen: v7x
topology: tpu7x:2x2x1
jax: 0.10.0
libtpu: 0.0.40
codegen_flags: <defaults>
</compile_context>

<pallas_src>
from functools import lru_cache, partial

import numpy as np

import jax
import jax.numpy as jnp
from jax.experimental import pallas as pl
from jax.experimental.pallas import tpu as pltpu


def _round_up(x, m):
    return (x + m - 1) // m * m


def _bilinear_matrix(n_in: int, n_out: int) -> np.ndarray:
    """1-D bilinear interpolation matrix (n_out, n_in), align_corners=True."""
    m = np.zeros((n_out, n_in), np.float32)
    if n_in == 1 or n_out == 1:
        m[:, 0] = 1.0
        return m
    scale = (n_in - 1) / (n_out - 1)
    for i in range(n_out):
        src = i * scale
        i0 = min(int(np.floor(src)), n_in - 1)
        i1 = min(i0 + 1, n_in - 1)
        f = src - i0
        m[i, i0] += 1.0 - f
        m[i, i1] += f
    return m


def _tap_masks(N, H2, W2) -> np.ndarray:
    """(9, N*H2*W2) 0/1 masks for the 9 conv taps (zero-padding boundary handling)."""
    L2 = N * H2 * W2
    p = np.arange(L2)
    h = (p // W2) % H2
    w = p % W2
    masks = np.zeros((9, L2), np.float32)
    for dy in range(3):
        for dx in range(3):
            hh = h + dy - 1
            ww = w + dx - 1
            ok = (hh >= 0) & (hh < H2) & (ww >= 0) & (ww < W2)
            masks[dy * 3 + dx] = ok.astype(np.float32)
    return masks


@lru_cache(maxsize=None)
def _up_constants(H1, W1, H2, W2, N):
    """Cached host constants: per-image upsample+pad matrix and the tap masks."""
    Hu, Wu = 2 * H1, 2 * W1
    diffY, diffX = H2 - Hu, W2 - Wu
    assert diffY >= 0 and diffX >= 0
    pad_t, pad_l = diffY // 2, diffX // 2
    mh = np.zeros((H2, H1), np.float32)
    mh[pad_t:pad_t + Hu, :] = _bilinear_matrix(H1, Hu)
    mw = np.zeros((W2, W1), np.float32)
    mw[pad_l:pad_l + Wu, :] = _bilinear_matrix(W1, Wu)
    up_m = np.kron(mh, mw)                 # (H2*W2, H1*W1), per image (no batch kron)
    upT = np.ascontiguousarray(up_m.T)     # (H1*W1, H2*W2)
    masks = _tap_masks(N, H2, W2)          # (9, N*H2*W2)
    return upT, masks


def make_up_kernel(N, C1, C2, H1, W1, H2, W2, Cmid_p, Cout_p, eps=1e-5):
    L2 = N * H2 * W2
    HW1 = H1 * W1
    Cin = C1 + C2
    f32 = jnp.float32
    bf16 = jnp.bfloat16

    def im2col_to(patch_ref, x, masks, c):
        # x: (c, L2) f32; writes (9*c, L2) bf16 taps (tap-major, channel-minor).
        # c is a multiple of 8, so every store lands on a sublane-tile boundary.
        for dy in range(3):
            for dx in range(3):
                k = dy * 3 + dx
                o = (dy - 1) * W2 + (dx - 1)        # flat-lane offset of this tap
                if o == 0:
                    tap = x                         # center tap: no shift / mask
                else:
                    tap = pltpu.roll(x, shift=(-o) % L2, axis=1) * masks[k:k + 1, :]
                patch_ref[k * c:(k + 1) * c, :] = tap.astype(bf16)

    def bn_relu(y, gamma, beta):
        # PyTorch training-mode BN over (N,H,W) == the lane axis, biased variance.
        c = y.shape[0]
        inv_l = 1.0 / L2
        stacked = jnp.concatenate([y, y * y], axis=0)           # one reduction pass
        s = jnp.sum(stacked, axis=1, keepdims=True) * inv_l     # (2c, 1)
        mean, msq = s[:c], s[c:]
        var = jnp.maximum(msq - mean * mean, 0.0)               # clamp cancellation
        scale = gamma * jax.lax.rsqrt(var + eps)
        shift = beta - mean * scale
        return jnp.maximum(y * scale + shift, 0.0)

    def kernel(x1_ref, x2_ref, upT_ref, masks_ref,
               w1_ref, g1_ref, b1_ref, w2_ref, g2_ref, b2_ref,
               out_ref, p1_ref, p2_ref):
        # ---- bilinear upsample (align_corners=True) + F.pad: per-image matmuls ----
        upT = upT_ref[...]                                       # (H1W1, H2W2) f32
        x1 = x1_ref[...]                                         # (C1, N*H1W1)
        ups = [jnp.dot(x1[:, n * HW1:(n + 1) * HW1], upT,
                       preferred_element_type=f32) for n in range(N)]
        up = jnp.concatenate(ups, axis=1) if N > 1 else ups[0]   # (C1, L2)

        # ---- materialized concat (torch.cat([x2, up], dim=1) channel order) ----
        x_cat = jnp.concatenate([x2_ref[...], up], axis=0)       # (Cin, L2), 8 rows
        masks = masks_ref[...]                                   # (9, L2)

        # ---- conv1: single im2col + single MXU matmul (bf16 operands, f32 acc) ----
        im2col_to(p1_ref, x_cat, masks, Cin)                     # (9*Cin, L2) bf16
        y1 = jnp.dot(w1_ref[...], p1_ref[...],
                     preferred_element_type=f32)                 # (Cmid_p, L2)
        y1 = bn_relu(y1, g1_ref[...], b1_ref[...])

        # ---- conv2 ----
        im2col_to(p2_ref, y1, masks, Cmid_p)                     # (9*Cmid_p, L2) bf16
        y2 = jnp.dot(w2_ref[...], p2_ref[...],
                     preferred_element_type=f32)                 # (Cout_p, L2)
        y2 = bn_relu(y2, g2_ref[...], b2_ref[...])

        out_ref[...] = y2.astype(out_ref.dtype)   # full (8,128)-tile aligned store

    return kernel


@partial(jax.jit, static_argnames=("out_channels",))
def up_forward(x1, x2, params, out_channels):
    """Up.forward(x1, x2). x1: (N, C1, H1, W1), x2: (N, C2, H2, W2), NCHW in/out."""
    N, C1, H1, W1 = x1.shape
    N2, C2, H2, W2 = x2.shape
    assert N == N2
    Cin = C1 + C2
    Cmid = Cin // 2                 # DoubleConv mid_channels = in_channels // 2
    Cout = out_channels
    Cmid_p = _round_up(Cmid, 8)     # pad channel rows to full sublane tiles
    Cout_p = _round_up(Cout, 8)
    L2 = N * H2 * W2

    upT_np, masks_np = _up_constants(H1, W1, H2, W2, N)
    upT = jnp.asarray(upT_np)                                    # (H1W1, H2W2) f32
    masks = jnp.asarray(masks_np)                                # (9, L2) f32

    # Channel-major, lane-dense activations (layout plumbing stays in XLA).
    x1_cm = jnp.transpose(x1.astype(jnp.float32), (1, 0, 2, 3)).reshape(C1, N * H1 * W1)
    x2_cm = jnp.transpose(x2.astype(jnp.float32), (1, 0, 2, 3)).reshape(C2, L2)

    # Conv weights -> tap-major (M, 9*Cin) matrices, bf16, rows zero-padded to x8.
    # PyTorch concat order is [x2, upsampled-x1] along channels == x_cat row order.
    w1 = jnp.transpose(params["w1"], (0, 2, 3, 1)).reshape(Cmid, 9 * Cin)
    w1 = jnp.pad(w1, ((0, Cmid_p - Cmid), (0, 0))).astype(jnp.bfloat16)
    w2 = jnp.pad(params["w2"], ((0, 0), (0, Cmid_p - Cmid), (0, 0), (0, 0)))
    w2 = jnp.transpose(w2, (0, 2, 3, 1)).reshape(Cout, 9 * Cmid_p)
    w2 = jnp.pad(w2, ((0, Cout_p - Cout), (0, 0))).astype(jnp.bfloat16)

    g1 = jnp.pad(params["g1"], (0, Cmid_p - Cmid)).reshape(Cmid_p, 1)
    b1 = jnp.pad(params["b1"], (0, Cmid_p - Cmid)).reshape(Cmid_p, 1)
    g2 = jnp.pad(params["g2"], (0, Cout_p - Cout)).reshape(Cout_p, 1)
    b2 = jnp.pad(params["b2"], (0, Cout_p - Cout)).reshape(Cout_p, 1)

    kernel = make_up_kernel(N, C1, C2, H1, W1, H2, W2, Cmid_p, Cout_p)
    vmem = pl.BlockSpec(memory_space=pltpu.MemorySpace.VMEM)

    out_cm = pl.pallas_call(
        kernel,
        out_shape=jax.ShapeDtypeStruct((Cout_p, L2), jnp.float32),
        in_specs=[vmem] * 10,
        out_specs=vmem,
        scratch_shapes=[pltpu.VMEM((9 * Cin, L2), jnp.bfloat16),
                        pltpu.VMEM((9 * Cmid_p, L2), jnp.bfloat16)],
    )(x1_cm, x2_cm, upT, masks, w1, g1, b1, w2, g2, b2)

    # Drop padded channel rows and go back to NCHW outside the kernel.
    out = out_cm[:Cout].reshape(Cout, N, H2, W2)
    return jnp.transpose(out, (1, 0, 2, 3))


def init_params(key, in_channels, out_channels):
    """DoubleConv(in_channels, out_channels, mid=in_channels//2) parameters."""
    mid = in_channels // 2
    k = jax.random.split(key, 6)
    return {
        # Conv2d(in, mid, 3, padding=1, bias=False)
        "w1": 0.1 * jax.random.normal(k[0], (mid, in_channels, 3, 3), jnp.float32),
        # BatchNorm2d(mid) affine params (non-trivial, deterministic)
        "g1": 1.0 + 0.05 * jax.random.normal(k[1], (mid,), jnp.float32),
        "b1": 0.05 * jax.random.normal(k[2], (mid,), jnp.float32),
        # Conv2d(mid, out, 3, padding=1, bias=False)
        "w2": 0.1 * jax.random.normal(k[3], (out_channels, mid, 3, 3), jnp.float32),
        # BatchNorm2d(out)
        "g2": 1.0 + 0.05 * jax.random.normal(k[4], (out_channels,), jnp.float32),
        "b2": 0.05 * jax.random.normal(k[5], (out_channels,), jnp.float32),
    }


if __name__ == "__main__":
    key = jax.random.PRNGKey(0)
    k_x1, k_x2, k_p = jax.random.split(key, 3)

    # Up(in_channels=8, out_channels=4, bilinear=True)
    # x1: low-res feature map (upsampled), x2: skip connection.
    N, C1, H1, W1 = 2, 4, 8, 8
    C2, H2, W2 = 4, 16, 16
    in_channels, out_channels = C1 + C2, 4

    x1 = jax.random.normal(k_x1, (N, C1, H1, W1), jnp.float32)
    x2 = jax.random.normal(k_x2, (N, C2, H2, W2), jnp.float32)
    params = init_params(k_p, in_channels, out_channels)

    out = up_forward(x1, x2, params, out_channels)
    out = jax.block_until_ready(out)

    assert out.shape == (N, out_channels, H2, W2), out.shape
    assert bool(jnp.all(jnp.isfinite(out)))
    print("KERNEL_OK")
</pallas_src>

<mosaic_0001>
module attributes {stable_mosaic.version = 11 : i64} {
  func.func @kernel(%arg0: memref<4x128xf32, #tpu.memory_space<vmem>>, %arg1: memref<4x512xf32, #tpu.memory_space<vmem>>, %arg2: memref<64x256xf32, #tpu.memory_space<vmem>>, %arg3: memref<9x512xf32, #tpu.memory_space<vmem>>, %arg4: memref<8x72xbf16, #tpu.memory_space<vmem>>, %arg5: memref<8x1xf32, #tpu.memory_space<vmem>>, %arg6: memref<8x1xf32, #tpu.memory_space<vmem>>, %arg7: memref<8x72xbf16, #tpu.memory_space<vmem>>, %arg8: memref<8x1xf32, #tpu.memory_space<vmem>>, %arg9: memref<8x1xf32, #tpu.memory_space<vmem>>, %arg10: memref<8x512xf32, #tpu.memory_space<vmem>>, %arg11: memref<72x512xbf16, #tpu.memory_space<vmem>>, %arg12: memref<72x512xbf16, #tpu.memory_space<vmem>>) attributes {dimension_semantics = [], scalar_prefetch = 0 : i64, scratch_operands = 2 : i64, tpu.core_type = #tpu.core_type<tc>} {
    %c0 = arith.constant 0 : index
    %c0_0 = arith.constant 0 : index
    %0 = vector.load %arg2[%c0, %c0_0] : memref<64x256xf32, #tpu.memory_space<vmem>>, vector<64x256xf32>
    %c0_1 = arith.constant 0 : index
    %c0_2 = arith.constant 0 : index
    %1 = vector.load %arg0[%c0_1, %c0_2] : memref<4x128xf32, #tpu.memory_space<vmem>>, vector<4x128xf32>
    %2 = vector.extract_strided_slice %1 {offsets = [0, 0], sizes = [4, 64], strides = [1, 1]} : vector<4x128xf32> to vector<4x64xf32>
    %cst = arith.constant dense<0.000000e+00> : vector<4x256xf32>
    %3 = tpu.matmul %2, %0, %cst {dimension_numbers = #tpu.dot_dimension_numbers<[1], [0], [0], [1], [0, 0, 1, 1], [], []>} : vector<4x64xf32>, vector<64x256xf32>, vector<4x256xf32> -> vector<4x256xf32>
    %4 = vector.extract_strided_slice %1 {offsets = [0, 64], sizes = [4, 64], strides = [1, 1]} : vector<4x128xf32> to vector<4x64xf32>
    %cst_3 = arith.constant dense<0.000000e+00> : vector<4x256xf32>
    %5 = tpu.matmul %4, %0, %cst_3 {dimension_numbers = #tpu.dot_dimension_numbers<[1], [0], [0], [1], [0, 0, 1, 1], [], []>} : vector<4x64xf32>, vector<64x256xf32>, vector<4x256xf32> -> vector<4x256xf32>
    %6 = tpu.concatenate %3, %5 in 1 : vector<4x256xf32>, vector<4x256xf32> -> vector<4x512xf32>
    %c0_4 = arith.constant 0 : index
    %c0_5 = arith.constant 0 : index
    %7 = vector.load %arg1[%c0_4, %c0_5] : memref<4x512xf32, #tpu.memory_space<vmem>>, vector<4x512xf32>
    %8 = tpu.concatenate %7, %6 in 0 : vector<4x512xf32>, vector<4x512xf32> -> vector<8x512xf32>
    %c0_6 = arith.constant 0 : index
    %c0_7 = arith.constant 0 : index
    %9 = vector.load %arg3[%c0_6, %c0_7] : memref<9x512xf32, #tpu.memory_space<vmem>>, vector<9x512xf32>
    %c17_i32 = arith.constant 17 : i32
    %10 = tpu.dynamic_rotate %8 by %c17_i32 dim 1 : vector<8x512xf32>, i32 -> vector<8x512xf32>
    %11 = vector.extract_strided_slice %9 {offsets = [0, 0], sizes = [1, 512], strides = [1, 1]} : vector<9x512xf32> to vector<1x512xf32>
    %12 = vector.broadcast %11 : vector<1x512xf32> to vector<8x512xf32>
    %13 = arith.mulf %10, %12 : vector<8x512xf32>
    %14 = arith.truncf %13 : vector<8x512xf32> to vector<8x512xbf16>
    %c0_8 = arith.constant 0 : index
    %c0_9 = arith.constant 0 : index
    %15 = vector.load %arg11[%c0_8, %c0_9] : memref<72x512xbf16, #tpu.memory_space<vmem>>, vector<8x512xbf16>
    tpu.vector_store %arg11[%c0_8, %c0_9], %14 {strides = array<i32>} : memref<72x512xbf16, #tpu.memory_space<vmem>>, vector<8x512xbf16>,
    %c16_i32 = arith.constant 16 : i32
    %16 = tpu.dynamic_rotate %8 by %c16_i32 dim 1 : vector<8x512xf32>, i32 -> vector<8x512xf32>
    %17 = vector.extract_strided_slice %9 {offsets = [1, 0], sizes = [1, 512], strides = [1, 1]} : vector<9x512xf32> to vector<1x512xf32>
    %18 = vector.broadcast %17 : vector<1x512xf32> to vector<8x512xf32>
    %19 = arith.mulf %16, %18 : vector<8x512xf32>
    %20 = arith.truncf %19 : vector<8x512xf32> to vector<8x512xbf16>
    %c8 = arith.constant 8 : index
    %c0_10 = arith.constant 0 : index
    %21 = vector.load %arg11[%c8, %c0_10] : memref<72x512xbf16, #tpu.memory_space<vmem>>, vector<8x512xbf16>
    tpu.vector_store %arg11[%c8, %c0_10], %20 {strides = array<i32>} : memref<72x512xbf16, #tpu.memory_space<vmem>>, vector<8x512xbf16>,
    %c15_i32 = arith.constant 15 : i32
    %22 = tpu.dynamic_rotate %8 by %c15_i32 dim 1 : vector<8x512xf32>, i32 -> vector<8x512xf32>
    %23 = vector.extract_strided_slice %9 {offsets = [2, 0], sizes = [1, 512], strides = [1, 1]} : vector<9x512xf32> to vector<1x512xf32>
    %24 = vector.broadcast %23 : vector<1x512xf32> to vector<8x512xf32>
    %25 = arith.mulf %22, %24 : vector<8x512xf32>
    %26 = arith.truncf %25 : vector<8x512xf32> to vector<8x512xbf16>
    %c16 = arith.constant 16 : index
    %c0_11 = arith.constant 0 : index
    %27 = vector.load %arg11[%c16, %c0_11] : memref<72x512xbf16, #tpu.memory_space<vmem>>, vector<8x512xbf16>
    tpu.vector_store %arg11[%c16, %c0_11], %26 {strides = array<i32>} : memref<72x512xbf16, #tpu.memory_space<vmem>>, vector<8x512xbf16>,
    %c1_i32 = arith.constant 1 : i32
    %28 = tpu.dynamic_rotate %8 by %c1_i32 dim 1 : vector<8x512xf32>, i32 -> vector<8x512xf32>
    %29 = vector.extract_strided_slice %9 {offsets = [3, 0], sizes = [1, 512], strides = [1, 1]} : vector<9x512xf32> to vector<1x512xf32>
    %30 = vector.broadcast %29 : vector<1x512xf32> to vector<8x512xf32>
    %31 = arith.mulf %28, %30 : vector<8x512xf32>
    %32 = arith.truncf %31 : vector<8x512xf32> to vector<8x512xbf16>
    %c24 = arith.constant 24 : index
    %c0_12 = arith.constant 0 : index
    %33 = vector.load %arg11[%c24, %c0_12] : memref<72x512xbf16, #tpu.memory_space<vmem>>, vector<8x512xbf16>
    tpu.vector_store %arg11[%c24, %c0_12], %32 {strides = array<i32>} : memref<72x512xbf16, #tpu.memory_space<vmem>>, vector<8x512xbf16>,
    %34 = arith.truncf %8 : vector<8x512xf32> to vector<8x512xbf16>
    %c32 = arith.constant 32 : index
    %c0_13 = arith.constant 0 : index
    %35 = vector.load %arg11[%c32, %c0_13] : memref<72x512xbf16, #tpu.memory_space<vmem>>, vector<8x512xbf16>
    tpu.vector_store %arg11[%c32, %c0_13], %34 {strides = array<i32>} : memref<72x512xbf16, #tpu.memory_space<vmem>>, vector<8x512xbf16>,
    %c511_i32 = arith.constant 511 : i32
    %36 = tpu.dynamic_rotate %8 by %c511_i32 dim 1 : vector<8x512xf32>, i32 -> vector<8x512xf32>
    %37 = vector.extract_strided_slice %9 {offsets = [5, 0], sizes = [1, 512], strides = [1, 1]} : vector<9x512xf32> to vector<1x512xf32>
    %38 = vector.broadcast %37 : vector<1x512xf32> to vector<8x512xf32>
    %39 = arith.mulf %36, %38 : vector<8x512xf32>
    %40 = arith.truncf %39 : vector<8x512xf32> to vector<8x512xbf16>
    %c40 = arith.constant 40 : index
    %c0_14 = arith.constant 0 : index
    %41 = vector.load %arg11[%c40, %c0_14] : memref<72x512xbf16, #tpu.memory_space<vmem>>, vector<8x512xbf16>
    tpu.vector_store %arg11[%c40, %c0_14], %40 {strides = array<i32>} : memref<72x512xbf16, #tpu.memory_space<vmem>>, vector<8x512xbf16>,
    %c497_i32 = arith.constant 497 : i32
    %42 = tpu.dynamic_rotate %8 by %c497_i32 dim 1 : vector<8x512xf32>, i32 -> vector<8x512xf32>
    %43 = vector.extract_strided_slice %9 {offsets = [6, 0], sizes = [1, 512], strides = [1, 1]} : vector<9x512xf32> to vector<1x512xf32>
    %44 = vector.broadcast %43 : vector<1x512xf32> to vector<8x512xf32>
    %45 = arith.mulf %42, %44 : vector<8x512xf32>
    %46 = arith.truncf %45 : vector<8x512xf32> to vector<8x512xbf16>
    %c48 = arith.constant 48 : index
    %c0_15 = arith.constant 0 : index
    %47 = vector.load %arg11[%c48, %c0_15] : memref<72x512xbf16, #tpu.memory_space<vmem>>, vector<8x512xbf16>
    tpu.vector_store %arg11[%c48, %c0_15], %46 {strides = array<i32>} : memref<72x512xbf16, #tpu.memory_space<vmem>>, vector<8x512xbf16>,
    %c496_i32 = arith.constant 496 : i32
    %48 = tpu.dynamic_rotate %8 by %c496_i32 dim 1 : vector<8x512xf32>, i32 -> vector<8x512xf32>
    %49 = vector.extract_strided_slice %9 {offsets = [7, 0], sizes = [1, 512], strides = [1, 1]} : vector<9x512xf32> to vector<1x512xf32>
    %50 = vector.broadcast %49 : vector<1x512xf32> to vector<8x512xf32>
    %51 = arith.mulf %48, %50 : vector<8x512xf32>
    %52 = arith.truncf %51 : vector<8x512xf32> to vector<8x512xbf16>
    %c56 = arith.constant 56 : index
    %c0_16 = arith.constant 0 : index
    %53 = vector.load %arg11[%c56, %c0_16] : memref<72x512xbf16, #tpu.memory_space<vmem>>, vector<8x512xbf16>
    tpu.vector_store %arg11[%c56, %c0_16], %52 {strides = array<i32>} : memref<72x512xbf16, #tpu.memory_space<vmem>>, vector<8x512xbf16>,
    %c495_i32 = arith.constant 495 : i32
    %54 = tpu.dynamic_rotate %8 by %c495_i32 dim 1 : vector<8x512xf32>, i32 -> vector<8x512xf32>
    %55 = vector.extract_strided_slice %9 {offsets = [8, 0], sizes = [1, 512], strides = [1, 1]} : vector<9x512xf32> to vector<1x512xf32>
    %56 = vector.broadcast %55 : vector<1x512xf32> to vector<8x512xf32>
    %57 = arith.mulf %54, %56 : vector<8x512xf32>
    %58 = arith.truncf %57 : vector<8x512xf32> to vector<8x512xbf16>
    %c64 = arith.constant 64 : index
    %c0_17 = arith.constant 0 : index
    %59 = vector.load %arg11[%c64, %c0_17] : memref<72x512xbf16, #tpu.memory_space<vmem>>, vector<8x512xbf16>
    tpu.vector_store %arg11[%c64, %c0_17], %58 {strides = array<i32>} : memref<72x512xbf16, #tpu.memory_space<vmem>>, vector<8x512xbf16>,
    %c0_18 = arith.constant 0 : index
    %c0_19 = arith.constant 0 : index
    %60 = vector.load %arg4[%c0_18, %c0_19] : memref<8x72xbf16, #tpu.memory_space<vmem>>, vector<8x72xbf16>
    %c0_20 = arith.constant 0 : index
    %c0_21 = arith.constant 0 : index
    %61 = vector.load %arg11[%c0_20, %c0_21] : memref<72x512xbf16, #tpu.memory_space<vmem>>, vector<72x512xbf16>
    %cst_22 = arith.constant dense<0.000000e+00> : vector<8x512xf32>
    %62 = tpu.matmul %60, %61, %cst_22 {dimension_numbers = #tpu.dot_dimension_numbers<[1], [0], [0], [1], [0, 0, 1, 1], [], []>} : vector<8x72xbf16>, vector<72x512xbf16>, vector<8x512xf32> -> vector<8x512xf32>
    %c0_23 = arith.constant 0 : index
    %c0_24 = arith.constant 0 : index
    %63 = vector.load %arg5[%c0_23, %c0_24] : memref<8x1xf32, #tpu.memory_space<vmem>>, vector<8x1xf32>
    %c0_25 = arith.constant 0 : index
    %c0_26 = arith.constant 0 : index
    %64 = vector.load %arg6[%c0_25, %c0_26] : memref<8x1xf32, #tpu.memory_space<vmem>>, vector<8x1xf32>
    %65 = arith.mulf %62, %62 : vector<8x512xf32>
    %66 = tpu.concatenate %62, %65 in 0 : vector<8x512xf32>, vector<8x512xf32> -> vector<16x512xf32>
    %cst_27 = arith.constant dense<0.000000e+00> : vector<16xf32>
    %67 = vector.multi_reduction <add>, %66, %cst_27 [1] : vector<16x512xf32> to vector<16xf32>
    %68 = vector.shape_cast %67 : vector<16xf32> to vector<16x1xf32>
    %cst_28 = arith.constant 0.001953125 : f32
    %69 = vector.broadcast %cst_28 : f32 to vector<16x1xf32>
    %70 = arith.mulf %68, %69 : vector<16x1xf32>
    %71 = vector.extract_strided_slice %70 {offsets = [0, 0], sizes = [8, 1], strides = [1, 1]} : vector<16x1xf32> to vector<8x1xf32>
    %72 = vector.extract_strided_slice %70 {offsets = [8, 0], sizes = [8, 1], strides = [1, 1]} : vector<16x1xf32> to vector<8x1xf32>
    %73 = arith.mulf %71, %71 : vector<8x1xf32>
    %74 = arith.subf %72, %73 : vector<8x1xf32>
    %cst_29 = arith.constant 0.000000e+00 : f32
    %75 = vector.broadcast %cst_29 : f32 to vector<8x1xf32>
    %76 = arith.maximumf %74, %75 : vector<8x1xf32>
    %cst_30 = arith.constant 9.99999974E-6 : f32
    %77 = vector.broadcast %cst_30 : f32 to vector<8x1xf32>
    %78 = arith.addf %76, %77 : vector<8x1xf32>
    %79 = math.rsqrt %78 : vector<8x1xf32>
    %80 = arith.mulf %63, %79 : vector<8x1xf32>
    %81 = arith.mulf %71, %80 : vector<8x1xf32>
    %82 = arith.subf %64, %81 : vector<8x1xf32>
    %83 = vector.broadcast %80 : vector<8x1xf32> to vector<8x512xf32>
    %84 = arith.mulf %62, %83 : vector<8x512xf32>
    %85 = vector.broadcast %82 : vector<8x1xf32> to vector<8x512xf32>
    %86 = arith.addf %84, %85 : vector<8x512xf32>
    %cst_31 = arith.constant 0.000000e+00 : f32
    %87 = vector.broadcast %cst_31 : f32 to vector<8x512xf32>
    %88 = arith.maximumf %86, %87 : vector<8x512xf32>
    %c17_i32_32 = arith.constant 17 : i32
    %89 = tpu.dynamic_rotate %88 by %c17_i32_32 dim 1 : vector<8x512xf32>, i32 -> vector<8x512xf32>
    %90 = vector.extract_strided_slice %9 {offsets = [0, 0], sizes = [1, 512], strides = [1, 1]} : vector<9x512xf32> to vector<1x512xf32>
    %91 = vector.broadcast %90 : vector<1x512xf32> to vector<8x512xf32>
    %92 = arith.mulf %89, %91 : vector<8x512xf32>
    %93 = arith.truncf %92 : vector<8x512xf32> to vector<8x512xbf16>
    %c0_33 = arith.constant 0 : index
    %c0_34 = arith.constant 0 : index
    %94 = vector.load %arg12[%c0_33, %c0_34] : memref<72x512xbf16, #tpu.memory_space<vmem>>, vector<8x512xbf16>
    tpu.vector_store %arg12[%c0_33, %c0_34], %93 {strides = array<i32>} : memref<72x512xbf16, #tpu.memory_space<vmem>>, vector<8x512xbf16>,
    %c16_i32_35 = arith.constant 16 : i32
    %95 = tpu.dynamic_rotate %88 by %c16_i32_35 dim 1 : vector<8x512xf32>, i32 -> vector<8x512xf32>
    %96 = vector.extract_strided_slice %9 {offsets = [1, 0], sizes = [1, 512], strides = [1, 1]} : vector<9x512xf32> to vector<1x512xf32>
    %97 = vector.broadcast %96 : vector<1x512xf32> to vector<8x512xf32>
    %98 = arith.mulf %95, %97 : vector<8x512xf32>
    %99 = arith.truncf %98 : vector<8x512xf32> to vector<8x512xbf16>
    %c8_36 = arith.constant 8 : index
    %c0_37 = arith.constant 0 : index
    %100 = vector.load %arg12[%c8_36, %c0_37] : memref<72x512xbf16, #tpu.memory_space<vmem>>, vector<8x512xbf16>
    tpu.vector_store %arg12[%c8_36, %c0_37], %99 {strides = array<i32>} : memref<72x512xbf16, #tpu.memory_space<vmem>>, vector<8x512xbf16>,
    %c15_i32_38 = arith.constant 15 : i32
    %101 = tpu.dynamic_rotate %88 by %c15_i32_38 dim 1 : vector<8x512xf32>, i32 -> vector<8x512xf32>
    %102 = vector.extract_strided_slice %9 {offsets = [2, 0], sizes = [1, 512], strides = [1, 1]} : vector<9x512xf32> to vector<1x512xf32>
    %103 = vector.broadcast %102 : vector<1x512xf32> to vector<8x512xf32>
    %104 = arith.mulf %101, %103 : vector<8x512xf32>
    %105 = arith.truncf %104 : vector<8x512xf32> to vector<8x512xbf16>
    %c16_39 = arith.constant 16 : index
    %c0_40 = arith.constant 0 : index
    %106 = vector.load %arg12[%c16_39, %c0_40] : memref<72x512xbf16, #tpu.memory_space<vmem>>, vector<8x512xbf16>
    tpu.vector_store %arg12[%c16_39, %c0_40], %105 {strides = array<i32>} : memref<72x512xbf16, #tpu.memory_space<vmem>>, vector<8x512xbf16>,
    %c1_i32_41 = arith.constant 1 : i32
    %107 = tpu.dynamic_rotate %88 by %c1_i32_41 dim 1 : vector<8x512xf32>, i32 -> vector<8x512xf32>
    %108 = vector.extract_strided_slice %9 {offsets = [3, 0], sizes = [1, 512], strides = [1, 1]} : vector<9x512xf32> to vector<1x512xf32>
    %109 = vector.broadcast %108 : vector<1x512xf32> to vector<8x512xf32>
    %110 = arith.mulf %107, %109 : vector<8x512xf32>
    %111 = arith.truncf %110 : vector<8x512xf32> to vector<8x512xbf16>
    %c24_42 = arith.constant 24 : index
    %c0_43 = arith.constant 0 : index
    %112 = vector.load %arg12[%c24_42, %c0_43] : memref<72x512xbf16, #tpu.memory_space<vmem>>, vector<8x512xbf16>
    tpu.vector_store %arg12[%c24_42, %c0_43], %111 {strides = array<i32>} : memref<72x512xbf16, #tpu.memory_space<vmem>>, vector<8x512xbf16>,
    %113 = arith.truncf %88 : vector<8x512xf32> to vector<8x512xbf16>
    %c32_44 = arith.constant 32 : index
    %c0_45 = arith.constant 0 : index
    %114 = vector.load %arg12[%c32_44, %c0_45] : memref<72x512xbf16, #tpu.memory_space<vmem>>, vector<8x512xbf16>
    tpu.vector_store %arg12[%c32_44, %c0_45], %113 {strides = array<i32>} : memref<72x512xbf16, #tpu.memory_space<vmem>>, vector<8x512xbf16>,
    %c511_i32_46 = arith.constant 511 : i32
    %115 = tpu.dynamic_rotate %88 by %c511_i32_46 dim 1 : vector<8x512xf32>, i32 -> vector<8x512xf32>
    %116 = vector.extract_strided_slice %9 {offsets = [5, 0], sizes = [1, 512], strides = [1, 1]} : vector<9x512xf32> to vector<1x512xf32>
    %117 = vector.broadcast %116 : vector<1x512xf32> to vector<8x512xf32>
    %118 = arith.mulf %115, %117 : vector<8x512xf32>
    %119 = arith.truncf %118 : vector<8x512xf32> to vector<8x512xbf16>
    %c40_47 = arith.constant 40 : index
    %c0_48 = arith.constant 0 : index
    %120 = vector.load %arg12[%c40_47, %c0_48] : memref<72x512xbf16, #tpu.memory_space<vmem>>, vector<8x512xbf16>
    tpu.vector_store %arg12[%c40_47, %c0_48], %119 {strides = array<i32>} : memref<72x512xbf16, #tpu.memory_space<vmem>>, vector<8x512xbf16>,
    %c497_i32_49 = arith.constant 497 : i32
    %121 = tpu.dynamic_rotate %88 by %c497_i32_49 dim 1 : vector<8x512xf32>, i32 -> vector<8x512xf32>
    %122 = vector.extract_strided_slice %9 {offsets = [6, 0], sizes = [1, 512], strides = [1, 1]} : vector<9x512xf32> to vector<1x512xf32>
    %123 = vector.broadcast %122 : vector<1x512xf32> to vector<8x512xf32>
    %124 = arith.mulf %121, %123 : vector<8x512xf32>
    %125 = arith.truncf %124 : vector<8x512xf32> to vector<8x512xbf16>
    %c48_50 = arith.constant 48 : index
    %c0_51 = arith.constant 0 : index
    %126 = vector.load %arg12[%c48_50, %c0_51] : memref<72x512xbf16, #tpu.memory_space<vmem>>, vector<8x512xbf16>
    tpu.vector_store %arg12[%c48_50, %c0_51], %125 {strides = array<i32>} : memref<72x512xbf16, #tpu.memory_space<vmem>>, vector<8x512xbf16>,
    %c496_i32_52 = arith.constant 496 : i32
    %127 = tpu.dynamic_rotate %88 by %c496_i32_52 dim 1 : vector<8x512xf32>, i32 -> vector<8x512xf32>
    %128 = vector.extract_strided_slice %9 {offsets = [7, 0], sizes = [1, 512], strides = [1, 1]} : vector<9x512xf32> to vector<1x512xf32>
    %129 = vector.broadcast %128 : vector<1x512xf32> to vector<8x512xf32>
    %130 = arith.mulf %127, %129 : vector<8x512xf32>
    %131 = arith.truncf %130 : vector<8x512xf32> to vector<8x512xbf16>
    %c56_53 = arith.constant 56 : index
    %c0_54 = arith.constant 0 : index
    %132 = vector.load %arg12[%c56_53, %c0_54] : memref<72x512xbf16, #tpu.memory_space<vmem>>, vector<8x512xbf16>
    tpu.vector_store %arg12[%c56_53, %c0_54], %131 {strides = array<i32>} : memref<72x512xbf16, #tpu.memory_space<vmem>>, vector<8x512xbf16>,
    %c495_i32_55 = arith.constant 495 : i32
    %133 = tpu.dynamic_rotate %88 by %c495_i32_55 dim 1 : vector<8x512xf32>, i32 -> vector<8x512xf32>
    %134 = vector.extract_strided_slice %9 {offsets = [8, 0], sizes = [1, 512], strides = [1, 1]} : vector<9x512xf32> to vector<1x512xf32>
    %135 = vector.broadcast %134 : vector<1x512xf32> to vector<8x512xf32>
    %136 = arith.mulf %133, %135 : vector<8x512xf32>
    %137 = arith.truncf %136 : vector<8x512xf32> to vector<8x512xbf16>
    %c64_56 = arith.constant 64 : index
    %c0_57 = arith.constant 0 : index
    %138 = vector.load %arg12[%c64_56, %c0_57] : memref<72x512xbf16, #tpu.memory_space<vmem>>, vector<8x512xbf16>
    tpu.vector_store %arg12[%c64_56, %c0_57], %137 {strides = array<i32>} : memref<72x512xbf16, #tpu.memory_space<vmem>>, vector<8x512xbf16>,
    %c0_58 = arith.constant 0 : index
    %c0_59 = arith.constant 0 : index
    %139 = vector.load %arg7[%c0_58, %c0_59] : memref<8x72xbf16, #tpu.memory_space<vmem>>, vector<8x72xbf16>
    %c0_60 = arith.constant 0 : index
    %c0_61 = arith.constant 0 : index
    %140 = vector.load %arg12[%c0_60, %c0_61] : memref<72x512xbf16, #tpu.memory_space<vmem>>, vector<72x512xbf16>
    %cst_62 = arith.constant dense<0.000000e+00> : vector<8x512xf32>
    %141 = tpu.matmul %139, %140, %cst_62 {dimension_numbers = #tpu.dot_dimension_numbers<[1], [0], [0], [1], [0, 0, 1, 1], [], []>} : vector<8x72xbf16>, vector<72x512xbf16>, vector<8x512xf32> -> vector<8x512xf32>
    %c0_63 = arith.constant 0 : index
    %c0_64 = arith.constant 0 : index
    %142 = vector.load %arg8[%c0_63, %c0_64] : memref<8x1xf32, #tpu.memory_space<vmem>>, vector<8x1xf32>
    %c0_65 = arith.constant 0 : index
    %c0_66 = arith.constant 0 : index
    %143 = vector.load %arg9[%c0_65, %c0_66] : memref<8x1xf32, #tpu.memory_space<vmem>>, vector<8x1xf32>
    %144 = arith.mulf %141, %141 : vector<8x512xf32>
    %145 = tpu.concatenate %141, %144 in 0 : vector<8x512xf32>, vector<8x512xf32> -> vector<16x512xf32>
    %cst_67 = arith.constant dense<0.000000e+00> : vector<16xf32>
    %146 = vector.multi_reduction <add>, %145, %cst_67 [1] : vector<16x512xf32> to vector<16xf32>
    %147 = vector.shape_cast %146 : vector<16xf32> to vector<16x1xf32>
    %cst_68 = arith.constant 0.001953125 : f32
    %148 = vector.broadcast %cst_68 : f32 to vector<16x1xf32>
    %149 = arith.mulf %147, %148 : vector<16x1xf32>
    %150 = vector.extract_strided_slice %149 {offsets = [0, 0], sizes = [8, 1], strides = [1, 1]} : vector<16x1xf32> to vector<8x1xf32>
    %151 = vector.extract_strided_slice %149 {offsets = [8, 0], sizes = [8, 1], strides = [1, 1]} : vector<16x1xf32> to vector<8x1xf32>
    %152 = arith.mulf %150, %150 : vector<8x1xf32>
    %153 = arith.subf %151, %152 : vector<8x1xf32>
    %cst_69 = arith.constant 0.000000e+00 : f32
    %154 = vector.broadcast %cst_69 : f32 to vector<8x1xf32>
    %155 = arith.maximumf %153, %154 : vector<8x1xf32>
    %cst_70 = arith.constant 9.99999974E-6 : f32
    %156 = vector.broadcast %cst_70 : f32 to vector<8x1xf32>
    %157 = arith.addf %155, %156 : vector<8x1xf32>
    %158 = math.rsqrt %157 : vector<8x1xf32>
    %159 = arith.mulf %142, %158 : vector<8x1xf32>
    %160 = arith.mulf %150, %159 : vector<8x1xf32>
    %161 = arith.subf %143, %160 : vector<8x1xf32>
    %162 = vector.broadcast %159 : vector<8x1xf32> to vector<8x512xf32>
    %163 = arith.mulf %141, %162 : vector<8x512xf32>
    %164 = vector.broadcast %161 : vector<8x1xf32> to vector<8x512xf32>
    %165 = arith.addf %163, %164 : vector<8x512xf32>
    %cst_71 = arith.constant 0.000000e+00 : f32
    %166 = vector.broadcast %cst_71 : f32 to vector<8x512xf32>
    %167 = arith.maximumf %165, %166 : vector<8x512xf32>
    %c0_72 = arith.constant 0 : index
    %c0_73 = arith.constant 0 : index
    %168 = vector.load %arg10[%c0_72, %c0_73] : memref<8x512xf32, #tpu.memory_space<vmem>>, vector<8x512xf32>
    tpu.vector_store %arg10[%c0_72, %c0_73], %167 {strides = array<i32>} : memref<8x512xf32, #tpu.memory_space<vmem>>, vector<8x512xf32>,
    return
  }
}

</mosaic_0001>

<llo_original>
// kernel: up_forward.1
$region0: #{up_forward.1}
  #allocation0 [shape = 'u32[]', space=smem, size = 0x4, offset = 0x4, fixed_abs, tag = 'smem constant byte address 0x4 - core index']
  #allocation1 [shape = 'u32[144,128]{1,0:T(1,128)}', space=vmem, size = 0x12000, scoped, tag = 'internal scratch']
  #allocation2 [shape = 'bf16[72,512]{1,0:T(8,128)(2,1)}', space=vmem, size = 0x12000, scoped, tag = 'scratch operand']
  #allocation3 [shape = 'bf16[72,512]{1,0:T(8,128)(2,1)}', space=vmem, size = 0x12000, scoped, tag = 'scratch operand']
  %s0 = inlined_call_operand.vmem [shape: f32[4,128], index: 0, kind: input, shape index: {}]
  %s1 = inlined_call_operand.vmem [shape: f32[4,512], index: 1, kind: input, shape index: {}]
  %s2 = inlined_call_operand.vmem [shape: f32[64,256], index: 2, kind: input, shape index: {}]
  %s3 = inlined_call_operand.vmem [shape: f32[9,512], index: 3, kind: input, shape index: {}]
  %s4 = inlined_call_operand.vmem [shape: bf16[8,72], index: 4, kind: input, shape index: {}]
  %s5 = inlined_call_operand.vmem [shape: f32[8,1], index: 5, kind: input, shape index: {}]
  %s6 = inlined_call_operand.vmem [shape: f32[8,1], index: 6, kind: input, shape index: {}]
  %s7 = inlined_call_operand.vmem [shape: bf16[8,72], index: 7, kind: input, shape index: {}]
  %s8 = inlined_call_operand.vmem [shape: f32[8,1], index: 8, kind: input, shape index: {}]
  %s9 = inlined_call_operand.vmem [shape: f32[8,1], index: 9, kind: input, shape index: {}]
  %s10 = inlined_call_operand.vmem [shape: f32[8,512], index: 10, kind: output, shape index: {}]
  %s11 = sld [smem:[#allocation0]]
  $region50: #{up_forward.1} parent=0
    _
  %s13 = ssub.s32 1, %s11
  %s14 = scalar_select 0, %s13, %s11
  // Predicated region
  $region2: #{up_forward.1} parent=0 // pred_check
    _
  $region3: #{up_forward.1} parent=0 // pred_check_branch
    %16 = sbr.rel (0) target = $region5
  $region4: #{up_forward.1} parent=0 // pred_region
    _
  $region5: #{up_forward.1} parent=0 // pred_fallthru
    _
  // Predicated region
  $region6: #{up_forward.1} parent=0 // pred_check
    _
  $region7: #{up_forward.1} parent=0 // pred_check_branch
    %18 = sbr.rel (0) target = $region9
  $region8: #{up_forward.1} parent=0 // pred_region
    _
  $region9: #{up_forward.1} parent=0 // pred_fallthru
    _
  // Predicated region
  $region10: #{up_forward.1} parent=0 // pred_check
    _
  $region11: #{up_forward.1} parent=0 // pred_check_branch
    %20 = sbr.rel (0) target = $region13
  $region12: #{up_forward.1} parent=0 // pred_region
    _
  $region13: #{up_forward.1} parent=0 // pred_fallthru
    _
  // Predicated region
  $region14: #{up_forward.1} parent=0 // pred_check
    _
  $region15: #{up_forward.1} parent=0 // pred_check_branch
    %22 = sbr.rel (0) target = $region17
  $region16: #{up_forward.1} parent=0 // pred_region
    _
  $region17: #{up_forward.1} parent=0 // pred_fallthru
    _
  // Predicated region
  $region18: #{up_forward.1} parent=0 // pred_check
    _
  $region19: #{up_forward.1} parent=0 // pred_check_branch
    %24 = sbr.rel (0) target = $region21
  $region20: #{up_forward.1} parent=0 // pred_region
    _
  $region21: #{up_forward.1} parent=0 // pred_fallthru
    _
  // Predicated region
  $region22: #{up_forward.1} parent=0 // pred_check
    _
  $region23: #{up_forward.1} parent=0 // pred_check_branch
    %26 = sbr.rel (0) target = $region25
  $region24: #{up_forward.1} parent=0 // pred_region
    _
  $region25: #{up_forward.1} parent=0 // pred_fallthru
    _
  // Predicated region
  $region26: #{up_forward.1} parent=0 // pred_check
    _
  $region27: #{up_forward.1} parent=0 // pred_check_branch
    %28 = sbr.rel (0) target = $region29
  $region28: #{up_forward.1} parent=0 // pred_region
    _
  $region29: #{up_forward.1} parent=0 // pred_fallthru
    _
  // Predicated region
  $region30: #{up_forward.1} parent=0 // pred_check
    _
  $region31: #{up_forward.1} parent=0 // pred_check_branch
    %30 = sbr.rel (0) target = $region33
  $region32: #{up_forward.1} parent=0 // pred_region
    _
  $region33: #{up_forward.1} parent=0 // pred_fallthru
    _
  // Predicated region
  $region34: #{up_forward.1} parent=0 // pred_check
    _
  $region35: #{up_forward.1} parent=0 // pred_check_branch
    %32 = sbr.rel (0) target = $region37
  $region36: #{up_forward.1} parent=0 // pred_region
    _
  $region37: #{up_forward.1} parent=0 // pred_fallthru
    _
  // Predicated region
  $region38: #{up_forward.1} parent=0 // pred_check
    _
  $region39: #{up_forward.1} parent=0 // pred_check_branch
    %34 = sbr.rel (0) target = $region41
  $region40: #{up_forward.1} parent=0 // pred_region
    _
  $region41: #{up_forward.1} parent=0 // pred_fallthru
    _
  %v36 = vld [vmem:[%s2] sm:$0xff]
  %v37 = vld [vmem:[%s2 + $0x8] sm:$0xff]
  %v38 = vld [vmem:[%s2 + $0x10] sm:$0xff]
  %v39 = vld [vmem:[%s2 + $0x18] sm:$0xff]
  %v40 = vld [vmem:[%s2 + $0x20] sm:$0xff]
  %v41 = vld [vmem:[%s2 + $0x28] sm:$0xff]
  %v42 = vld [vmem:[%s2 + $0x30] sm:$0xff]
  %v43 = vld [vmem:[%s2 + $0x38] sm:$0xff]
  %v44 = vld [vmem:[%s2 + $0x40] sm:$0xff]
  %v45 = vld [vmem:[%s2 + $0x48] sm:$0xff]
  %v46 = vld [vmem:[%s2 + $0x50] sm:$0xff]
  %v47 = vld [vmem:[%s2 + $0x58] sm:$0xff]
  %v48 = vld [vmem:[%s2 + $0x60] sm:$0xff]
  %v49 = vld [vmem:[%s2 + $0x68] sm:$0xff]
  %v50 = vld [vmem:[%s2 + $0x70] sm:$0xff]
  %v51 = vld [vmem:[%s2 + $0x78] sm:$0xff]
  %v52 = vld [vmem:[%s0] sm:$0xf]
  %vm53 = vcmask 523264
  %v55 = vsel %vm53, %v52, 0
  %57 = vmatprep.subr.mxu0 %v37
  %58 = vmatpush1.msra.mxu0 %v36
  %59 = vmatprep.subr.mxu0 %v39
  %60 = vmatpush1.msra.mxu0 %v38
  %61 = vmatprep.subr.mxu0 %v41
  %62 = vmatpush1.msra.mxu0 %v40
  %63 = vmatprep.subr.mxu0 %v43
  %64 = vmatpush1.msra.mxu0 %v42
  %65 = vmatprep.subr.mxu0 %v45
  %66 = vmatpush1.msra.mxu0 %v44
  %67 = vmatprep.subr.mxu0 %v47
  %68 = vmatpush1.msra.mxu0 %v46
  %69 = vmatprep.subr.mxu0 %v49
  %70 = vmatpush1.msra.mxu0 %v48
  %71 = vmatprep.subr.mxu0 %v51
  %72 = vmatpush1.msra.mxu0 %v50
  %73 = vmatprep.subr.mxu0 0.0
  %74 = vmatpush1.msra.mxu0 0.0
  %75 = vmatprep.subr.mxu0 0.0
  %76 = vmatpush1.msra.mxu0 0.0
  %77 = vmatprep.subr.mxu0 0.0
  %78 = vmatpush1.msra.mxu0 0.0
  %79 = vmatprep.subr.mxu0 0.0
  %80 = vmatpush1.msra.mxu0 0.0
  %81 = vmatprep.subr.mxu0 0.0
  %82 = vmatpush1.msra.mxu0 0.0
  %83 = vmatprep.subr.mxu0 0.0
  %84 = vmatpush1.msra.mxu0 0.0
  %85 = vmatprep.subr.mxu0 0.0
  %86 = vmatpush1.msra.mxu0 0.0
  %87 = vmatprep.subr.mxu0 0.0
  %88 = vmatpush1.msra.mxu0 0.0
  %89 = vmatprep.subr.mxu0 0.0
  %90 = vmatpush1.msra.mxu0 0.0
  %91 = vmatprep.subr.mxu0 0.0
  %92 = vmatpush1.msra.mxu0 0.0
  %93 = vmatprep.subr.mxu0 0.0
  %94 = vmatpush1.msra.mxu0 0.0
  %95 = vmatprep.subr.mxu0 0.0
  %96 = vmatpush1.msra.mxu0 0.0
  %97 = vmatprep.subr.mxu0 0.0
  %98 = vmatpush1.msra.mxu0 0.0
  %99 = vmatprep.subr.mxu0 0.0
  %100 = vmatpush1.msra.mxu0 0.0
  %101 = vmatprep.subr.mxu0 0.0
  %102 = vmatpush1.msra.mxu0 0.0
  %103 = vmatprep.subr.mxu0 0.0
  %104 = vmatpush1.msra.mxu0 0.0
  %105 = vmatprep.subr.mxu0 0.0
  %106 = vmatpush1.msra.mxu0 0.0
  %107 = vmatprep.subr.mxu0 0.0
  %108 = vmatpush1.msra.mxu0 0.0
  %109 = vmatprep.subr.mxu0 0.0
  %110 = vmatpush1.msra.mxu0 0.0
  %111 = vmatprep.subr.mxu0 0.0
  %112 = vmatpush1.msra.mxu0 0.0
  %113 = vmatprep.subr.mxu0 0.0
  %114 = vmatpush1.msra.mxu0 0.0
  %115 = vmatprep.subr.mxu0 0.0
  %116 = vmatpush1.msra.mxu0 0.0
  %117 = vmatprep.subr.mxu0 0.0
  %118 = vmatpush1.msra.mxu0 0.0
  %119 = vmatprep.subr.mxu0 0.0
  %120 = vmatpush1.msra.mxu0 0.0
  %121 = vmatprep.mubr.f32.mxu0 0.0
  %122 = vmatmul.mubr.f32.gmra.mrb[0].mxu0 %v55
  %v123 = vpop.f32.mrb[0].mxu0
  %v124 = vadd.f32 0.0, %v123
  %v125 = vpop.f32.mrb[0].mxu0
  %v126 = vadd.f32 0.0, %v125
  %127 = vdwg.mxu0
  %128 = vrot.lane.b32.xlu0 %v52, 64
  %v129 = vpop.permute.xlu0 %128
  %v130 = vsel %vm53, %v129, 0
  %132 = vmatprep.subr.mxu0 %v37
  %133 = vmatpush1.msra.mxu0 %v36
  %134 = vmatprep.subr.mxu0 %v39
  %135 = vmatpush1.msra.mxu0 %v38
  %136 = vmatprep.subr.mxu0 %v41
  %137 = vmatpush1.msra.mxu0 %v40
  %138 = vmatprep.subr.mxu0 %v43
  %139 = vmatpush1.msra.mxu0 %v42
  %140 = vmatprep.subr.mxu0 %v45
  %141 = vmatpush1.msra.mxu0 %v44
  %142 = vmatprep.subr.mxu0 %v47
  %143 = vmatpush1.msra.mxu0 %v46
  %144 = vmatprep.subr.mxu0 %v49
  %145 = vmatpush1.msra.mxu0 %v48
  %146 = vmatprep.subr.mxu0 %v51
  %147 = vmatpush1.msra.mxu0 %v50
  %148 = vmatprep.subr.mxu0 0.0
  %149 = vmatpush1.msra.mxu0 0.0
  %150 = vmatprep.subr.mxu0 0.0
  %151 = vmatpush1.msra.mxu0 0.0
  %152 = vmatprep.subr.mxu0 0.0
  %153 = vmatpush1.msra.mxu0 0.0
  %154 = vmatprep.subr.mxu0 0.0
  %155 = vmatpush1.msra.mxu0 0.0
  %156 = vmatprep.subr.mxu0 0.0
  %157 = vmatpush1.msra.mxu0 0.0
  %158 = vmatprep.subr.mxu0 0.0
  %159 = vmatpush1.msra.mxu0 0.0
  %160 = vmatprep.subr.mxu0 0.0
  %161 = vmatpush1.msra.mxu0 0.0
  %162 = vmatprep.subr.mxu0 0.0
  %163 = vmatpush1.msra.mxu0 0.0
  %164 = vmatprep.subr.mxu0 0.0
  %165 = vmatpush1.msra.mxu0 0.0
  %166 = vmatprep.subr.mxu0 0.0
  %167 = vmatpush1.msra.mxu0 0.0
  %168 = vmatprep.subr.mxu0 0.0
  %169 = vmatpush1.msra.mxu0 0.0
  %170 = vmatprep.subr.mxu0 0.0
  %171 = vmatpush1.msra.mxu0 0.0
  %172 = vmatprep.subr.mxu0 0.0
  %173 = vmatpush1.msra.mxu0 0.0
  %174 = vmatprep.subr.mxu0 0.0
  %175 = vmatpush1.msra.mxu0 0.0
  %176 = vmatprep.subr.mxu0 0.0
  %177 = vmatpush1.msra.mxu0 0.0
  %178 = vmatprep.subr.mxu0 0.0
  %179 = vmatpush1.msra.mxu0 0.0
  %180 = vmatprep.subr.mxu0 0.0
  %181 = vmatpush1.msra.mxu0 0.0
  %182 = vmatprep.subr.mxu0 0.0
  %183 = vmatpush1.msra.mxu0 0.0
  %184 = vmatprep.subr.mxu0 0.0
  %185 = vmatpush1.msra.mxu0 0.0
  %186 = vmatprep.subr.mxu0 0.0
  %187 = vmatpush1.msra.mxu0 0.0
  %188 = vmatprep.subr.mxu0 0.0
  %189 = vmatpush1.msra.mxu0 0.0
  %190 = vmatprep.subr.mxu0 0.0
  %191 = vmatpush1.msra.mxu0 0.0
  %192 = vmatprep.subr.mxu0 0.0
  %193 = vmatpush1.msra.mxu0 0.0
  %194 = vmatprep.subr.mxu0 0.0
  %195 = vmatpush1.msra.mxu0 0.0
  %196 = vmatprep.mubr.f32.mxu0 0.0
  %197 = vmatmul.mubr.f32.gmra.mrb[0].mxu0 %v130
  %v198 = vpop.f32.mrb[0].mxu0
  %v199 = vadd.f32 0.0, %v198
  %v200 = vpop.f32.mrb[0].mxu0
  %v201 = vadd.f32 0.0, %v200
  %202 = vdwg.mxu0
  %v203 = vld [vmem:[%s1] sm:$0xff]
  %v204 = vld [vmem:[%s1 + $0x8] sm:$0xff]
  %v207 = vcombine.high %v203, %v203
  %v208 = vcombine.high %v204, %v204
  %v215 = vrot.slane %v124, 4
  %v216 = vrot.slane %v126, 4
  %v217 = vrot.slane %v199, 4
  %v218 = vrot.slane %v201, 4
  %vm223 = vcmask 1043456
  %v224 = vsel %vm223, %v203, %v215
  %v225 = vsel %vm223, %v207, %v216
  %v226 = vsel %vm223, %v204, %v217
  %v227 = vsel %vm223, %v208, %v218
  %v228 = vld [vmem:[%s3] sm:$0xff]
  %v229 = vld [vmem:[%s3 + $0x8] sm:$0xff]
  %v230 = vld [vmem:[%s3 + $0x10] sm:$0xff]
  %v231 = vld [vmem:[%s3 + $0x18] sm:$0xff]
  %v232 = vld [vmem:[%s3 + $0x20] sm:$0x1]
  %v233 = vld [vmem:[%s3 + $0x28] sm:$0x1]
  %v234 = vld [vmem:[%s3 + $0x30] sm:$0x1]
  %v235 = vld [vmem:[%s3 + $0x38] sm:$0x1]
  %236 = vrot.lane.b32.xlu0 %v224, 17
  %v237 = vpop.permute.xlu0 %236
  %238 = vrot.lane.b32.xlu0 %v225, 17
  %v239 = vpop.permute.xlu0 %238
  %240 = vrot.lane.b32.xlu0 %v226, 17
  %v241 = vpop.permute.xlu0 %240
  %242 = vrot.lane.b32.xlu0 %v227, 17
  %v243 = vpop.permute.xlu0 %242
  %v244 = vlaneseq
  %v245 = vand.u32 %v244, 127
  %vm246 = vcmp.lt.s32.totalorder %v245, 17
  %v247 = vsel %vm246, %v241, %v243
  %v248 = vsel %vm246, %v239, %v241
  %v249 = vsel %vm246, %v237, %v239
  %v250 = vsel %vm246, %v243, %v237
  %v251 = vlaneseq
  %v252 = vshrl.u32 %v251, 7
  %v253 = vsub.s32 0, %v252
  %v254 = vrot.slane %v228, %v253
  %v255 = vlaneseq
  %v256 = vshrl.u32 %v255, 7
  %v257 = vsub.s32 0, %v256
  %v258 = vrot.slane %v229, %v257
  %v259 = vlaneseq
  %v260 = vshrl.u32 %v259, 7
  %v261 = vsub.s32 0, %v260
  %v262 = vrot.slane %v230, %v261
  %v263 = vlaneseq
  %v264 = vshrl.u32 %v263, 7
  %v265 = vsub.s32 0, %v264
  %v266 = vrot.slane %v231, %v265
  %v267 = vmul.f32 %v250, %v254
  %v268 = vmul.f32 %v249, %v258
  %v269 = vmul.f32 %v248, %v262
  %v270 = vmul.f32 %v247, %v266
  %v271 = vpack.c.bf16 %v267, %v267
  %v272 = vpack.c.bf16 %v268, %v268
  %v273 = vpack.c.bf16 %v269, %v269
  %v274 = vpack.c.bf16 %v270, %v270
  %v279 = vunpack.c.l.b16 %v271
  %v280 = vunpack.c.l.b16 %v272
  %v281 = vunpack.c.l.b16 %v273
  %v282 = vunpack.c.l.b16 %v274
  %v283 = vpack.c.b16 %v280, %v279
  %v284 = vpack.c.b16 %v282, %v281
  %287 = vst [vmem:[#allocation2] sm:$0xff] %v283
  %288 = vst [vmem:[#allocation2 + $0x8] sm:$0xff] %v284
  %289 = vrot.lane.b32.xlu0 %v224, 16
  %v290 = vpop.permute.xlu0 %289
  %291 = vrot.lane.b32.xlu0 %v225, 16
  %v292 = vpop.permute.xlu0 %291
  %293 = vrot.lane.b32.xlu0 %v226, 16
  %v294 = vpop.permute.xlu0 %293
  %295 = vrot.lane.b32.xlu0 %v227, 16
  %v296 = vpop.permute.xlu0 %295
  %vm297 = vcmp.lt.s32.totalorder %v245, 16
  %v298 = vsel %vm297, %v294, %v296
  %v299 = vsel %vm297, %v292, %v294
  %v300 = vsel %vm297, %v290, %v292
  %v301 = vsel %vm297, %v296, %v290
  %v302 = vlaneseq
  %v303 = vshrl.u32 %v302, 7
  %v304 = vsub.s32 1, %v303
  %v305 = vrot.slane %v228, %v304
  %v306 = vlaneseq
  %v307 = vshrl.u32 %v306, 7
  %v308 = vsub.s32 1, %v307
  %v309 = vrot.slane %v229, %v308
  %v310 = vlaneseq
  %v311 = vshrl.u32 %v310, 7
  %v312 = vsub.s32 1, %v311
  %v313 = vrot.slane %v230, %v312
  %v314 = vlaneseq
  %v315 = vshrl.u32 %v314, 7
  %v316 = vsub.s32 1, %v315
  %v317 = vrot.slane %v231, %v316
  %v318 = vmul.f32 %v301, %v305
  %v319 = vmul.f32 %v300, %v309
  %v320 = vmul.f32 %v299, %v313
  %v321 = vmul.f32 %v298, %v317
  %v322 = vpack.c.bf16 %v318, %v318
  %v323 = vpack.c.bf16 %v319, %v319
  %v324 = vpack.c.bf16 %v320, %v320
  %v325 = vpack.c.bf16 %v321, %v321
  %v330 = vunpack.c.l.b16 %v322
  %v331 = vunpack.c.l.b16 %v323
  %v332 = vunpack.c.l.b16 %v324
  %v333 = vunpack.c.l.b16 %v325
  %v334 = vpack.c.b16 %v331, %v330
  %v335 = vpack.c.b16 %v333, %v332
  %338 = vst [vmem:[#allocation2 + $0x10] sm:$0xff] %v334
  %339 = vst [vmem:[#allocation2 + $0x18] sm:$0xff] %v335
  %340 = vrot.lane.b32.xlu0 %v224, 15
  %v341 = vpop.permute.xlu0 %340
  %342 = vrot.lane.b32.xlu0 %v225, 15
  %v343 = vpop.permute.xlu0 %342
  %344 = vrot.lane.b32.xlu0 %v226, 15
  %v345 = vpop.permute.xlu0 %344
  %346 = vrot.lane.b32.xlu0 %v227, 15
  %v347 = vpop.permute.xlu0 %346
  %vm348 = vcmp.lt.s32.totalorder %v245, 15
  %v349 = vsel %vm348, %v345, %v347
  %v350 = vsel %vm348, %v343, %v345
  %v351 = vsel %vm348, %v341, %v343
  %v352 = vsel %vm348, %v347, %v341
  %v353 = vlaneseq
  %v354 = vshrl.u32 %v353, 7
  %v355 = vsub.s32 2, %v354
  %v356 = vrot.slane %v228, %v355
  %v357 = vlaneseq
  %v358 = vshrl.u32 %v357, 7
  %v359 = vsub.s32 2, %v358
  %v360 = vrot.slane %v229, %v359
  %v361 = vlaneseq
  %v362 = vshrl.u32 %v361, 7
  %v363 = vsub.s32 2, %v362
  %v364 = vrot.slane %v230, %v363
  %v365 = vlaneseq
  %v366 = vshrl.u32 %v365, 7
  %v367 = vsub.s32 2, %v366
  %v368 = vrot.slane %v231, %v367
  %v369 = vmul.f32 %v352, %v356
  %v370 = vmul.f32 %v351, %v360
  %v371 = vmul.f32 %v350, %v364
  %v372 = vmul.f32 %v349, %v368
  %v373 = vpack.c.bf16 %v369, %v369
  %v374 = vpack.c.bf16 %v370, %v370
  %v375 = vpack.c.bf16 %v371, %v371
  %v376 = vpack.c.bf16 %v372, %v372
  %v381 = vunpack.c.l.b16 %v373
  %v382 = vunpack.c.l.b16 %v374
  %v383 = vunpack.c.l.b16 %v375
  %v384 = vunpack.c.l.b16 %v376
  %v385 = vpack.c.b16 %v382, %v381
  %v386 = vpack.c.b16 %v384, %v383
  %389 = vst [vmem:[#allocation2 + $0x20] sm:$0xff] %v385
  %390 = vst [vmem:[#allocation2 + $0x28] sm:$0xff] %v386
  %391 = vrot.lane.b32.xlu0 %v224, 1
  %v392 = vpop.permute.xlu0 %391
  %393 = vrot.lane.b32.xlu0 %v225, 1
  %v394 = vpop.permute.xlu0 %393
  %395 = vrot.lane.b32.xlu0 %v226, 1
  %v396 = vpop.permute.xlu0 %395
  %397 = vrot.lane.b32.xlu0 %v227, 1
  %v398 = vpop.permute.xlu0 %397
  %vm399 = vcmp.lt.s32.totalorder %v245, 1
  %v400 = vsel %vm399, %v396, %v398
  %v401 = vsel %vm399, %v394, %v396
  %v402 = vsel %vm399, %v392, %v394
  %v403 = vsel %vm399, %v398, %v392
  %v404 = vlaneseq
  %v405 = vshrl.u32 %v404, 7
  %v406 = vsub.s32 3, %v405
  %v407 = vrot.slane %v228, %v406
  %v408 = vlaneseq
  %v409 = vshrl.u32 %v408, 7
  %v410 = vsub.s32 3, %v409
  %v411 = vrot.slane %v229, %v410
  %v412 = vlaneseq
  %v413 = vshrl.u32 %v412, 7
  %v414 = vsub.s32 3, %v413
  %v415 = vrot.slane %v230, %v414
  %v416 = vlaneseq
  %v417 = vshrl.u32 %v416, 7
  %v418 = vsub.s32 3, %v417
  %v419 = vrot.slane %v231, %v418
  %v420 = vmul.f32 %v403, %v407
  %v421 = vmul.f32 %v402, %v411
  %v422 = vmul.f32 %v401, %v415
  %v423 = vmul.f32 %v400, %v419
  %v424 = vpack.c.bf16 %v420, %v420
  %v425 = vpack.c.bf16 %v421, %v421
  %v426 = vpack.c.bf16 %v422, %v422
  %v427 = vpack.c.bf16 %v423, %v423
  %v432 = vunpack.c.l.b16 %v424
  %v433 = vunpack.c.l.b16 %v425
  %v434 = vunpack.c.l.b16 %v426
  %v435 = vunpack.c.l.b16 %v427
  %v436 = vpack.c.b16 %v433, %v432
  %v437 = vpack.c.b16 %v435, %v434
  %440 = vst [vmem:[#allocation2 + $0x30] sm:$0xff] %v436
  %441 = vst [vmem:[#allocation2 + $0x38] sm:$0xff] %v437
  %v442 = vpack.c.bf16 %v224, %v224
  %v443 = vpack.c.bf16 %v225, %v225
  %v444 = vpack.c.bf16 %v226, %v226
  %v445 = vpack.c.bf16 %v227, %v227
  %v450 = vunpack.c.l.b16 %v442
  %v451 = vunpack.c.l.b16 %v443
  %v452 = vunpack.c.l.b16 %v444
  %v453 = vunpack.c.l.b16 %v445
  %v454 = vpack.c.b16 %v451, %v450
  %v455 = vpack.c.b16 %v453, %v452
  %458 = vst [vmem:[#allocation2 + $0x40] sm:$0xff] %v454
  %459 = vst [vmem:[#allocation2 + $0x48] sm:$0xff] %v455
  %460 = vrot.lane.b32.xlu0 %v224, 127
  %v461 = vpop.permute.xlu0 %460
  %462 = vrot.lane.b32.xlu0 %v225, 127
  %v463 = vpop.permute.xlu0 %462
  %464 = vrot.lane.b32.xlu0 %v226, 127
  %v465 = vpop.permute.xlu0 %464
  %466 = vrot.lane.b32.xlu0 %v227, 127
  %v467 = vpop.permute.xlu0 %466
  %vm468 = vcmp.lt.s32.totalorder %v245, 127
  %v469 = vsel %vm468, %v465, %v467
  %v470 = vsel %vm468, %v463, %v465
  %v471 = vsel %vm468, %v461, %v463
  %v472 = vsel %vm468, %v467, %v461
  %v473 = vlaneseq
  %v474 = vshrl.u32 %v473, 7
  %v475 = vsub.s32 5, %v474
  %v476 = vrot.slane %v228, %v475
  %v477 = vlaneseq
  %v478 = vshrl.u32 %v477, 7
  %v479 = vsub.s32 5, %v478
  %v480 = vrot.slane %v229, %v479
  %v481 = vlaneseq
  %v482 = vshrl.u32 %v481, 7
  %v483 = vsub.s32 5, %v482
  %v484 = vrot.slane %v230, %v483
  %v485 = vlaneseq
  %v486 = vshrl.u32 %v485, 7
  %v487 = vsub.s32 5, %v486
  %v488 = vrot.slane %v231, %v487
  %v489 = vmul.f32 %v471, %v476
  %v490 = vmul.f32 %v470, %v480
  %v491 = vmul.f32 %v469, %v484
  %v492 = vmul.f32 %v472, %v488
  %v493 = vpack.c.bf16 %v489, %v489
  %v494 = vpack.c.bf16 %v490, %v490
  %v495 = vpack.c.bf16 %v491, %v491
  %v496 = vpack.c.bf16 %v492, %v492
  %v501 = vunpack.c.l.b16 %v493
  %v502 = vunpack.c.l.b16 %v494
  %v503 = vunpack.c.l.b16 %v495
  %v504 = vunpack.c.l.b16 %v496
  %v505 = vpack.c.b16 %v502, %v501
  %v506 = vpack.c.b16 %v504, %v503
  %509 = vst [vmem:[#allocation2 + $0x50] sm:$0xff] %v505
  %510 = vst [vmem:[#allocation2 + $0x58] sm:$0xff] %v506
  %511 = vrot.lane.b32.xlu0 %v224, 113
  %v512 = vpop.permute.xlu0 %511
  %513 = vrot.lane.b32.xlu0 %v225, 113
  %v514 = vpop.permute.xlu0 %513
  %515 = vrot.lane.b32.xlu0 %v226, 113
  %v516 = vpop.permute.xlu0 %515
  %517 = vrot.lane.b32.xlu0 %v227, 113
  %v518 = vpop.permute.xlu0 %517
  %vm519 = vcmp.lt.s32.totalorder %v245, 113
  %v520 = vsel %vm519, %v516, %v518
  %v521 = vsel %vm519, %v514, %v516
  %v522 = vsel %vm519, %v512, %v514
  %v523 = vsel %vm519, %v518, %v512
  %v524 = vlaneseq
  %v525 = vshrl.u32 %v524, 7
  %v526 = vsub.s32 6, %v525
  %v527 = vrot.slane %v228, %v526
  %v528 = vlaneseq
  %v529 = vshrl.u32 %v528, 7
  %v530 = vsub.s32 6, %v529
  %v531 = vrot.slane %v229, %v530
  %v532 = vlaneseq
  %v533 = vshrl.u32 %v532, 7
  %v534 = vsub.s32 6, %v533
  %v535 = vrot.slane %v230, %v534
  %v536 = vlaneseq
  %v537 = vshrl.u32 %v536, 7
  %v538 = vsub.s32 6, %v537
  %v539 = vrot.slane %v231, %v538
  %v540 = vmul.f32 %v522, %v527
  %v541 = vmul.f32 %v521, %v531
  %v542 = vmul.f32 %v520, %v535
  %v543 = vmul.f32 %v523, %v539
  %v544 = vpack.c.bf16 %v540, %v540
  %v545 = vpack.c.bf16 %v541, %v541
  %v546 = vpack.c.bf16 %v542, %v542
  %v547 = vpack.c.bf16 %v543, %v543
  %v552 = vunpack.c.l.b16 %v544
  %v553 = vunpack.c.l.b16 %v545
  %v554 = vunpack.c.l.b16 %v546
  %v555 = vunpack.c.l.b16 %v547
  %v556 = vpack.c.b16 %v553, %v552
  %v557 = vpack.c.b16 %v555, %v554
  %560 = vst [vmem:[#allocation2 + $0x60] sm:$0xff] %v556
  %561 = vst [vmem:[#allocation2 + $0x68] sm:$0xff] %v557
  %562 = vrot.lane.b32.xlu0 %v224, 112
  %v563 = vpop.permute.xlu0 %562
  %564 = vrot.lane.b32.xlu0 %v225, 112
  %v565 = vpop.permute.xlu0 %564
  %566 = vrot.lane.b32.xlu0 %v226, 112
  %v567 = vpop.permute.xlu0 %566
  %568 = vrot.lane.b32.xlu0 %v227, 112
  %v569 = vpop.permute.xlu0 %568
  %vm570 = vcmp.lt.s32.totalorder %v245, 112
  %v571 = vsel %vm570, %v567, %v569
  %v572 = vsel %vm570, %v565, %v567
  %v573 = vsel %vm570, %v563, %v565
  %v574 = vsel %vm570, %v569, %v563
  %v575 = vlaneseq
  %v576 = vshrl.u32 %v575, 7
  %v577 = vsub.s32 7, %v576
  %v578 = vrot.slane %v228, %v577
  %v579 = vlaneseq
  %v580 = vshrl.u32 %v579, 7
  %v581 = vsub.s32 7, %v580
  %v582 = vrot.slane %v229, %v581
  %v583 = vlaneseq
  %v584 = vshrl.u32 %v583, 7
  %v585 = vsub.s32 7, %v584
  %v586 = vrot.slane %v230, %v585
  %v587 = vlaneseq
  %v588 = vshrl.u32 %v587, 7
  %v589 = vsub.s32 7, %v588
  %v590 = vrot.slane %v231, %v589
  %v591 = vmul.f32 %v573, %v578
  %v592 = vmul.f32 %v572, %v582
  %v593 = vmul.f32 %v571, %v586
  %v594 = vmul.f32 %v574, %v590
  %v595 = vpack.c.bf16 %v591, %v591
  %v596 = vpack.c.bf16 %v592, %v592
  %v597 = vpack.c.bf16 %v593, %v593
  %v598 = vpack.c.bf16 %v594, %v594
  %v603 = vunpack.c.l.b16 %v595
  %v604 = vunpack.c.l.b16 %v596
  %v605 = vunpack.c.l.b16 %v597
  %v606 = vunpack.c.l.b16 %v598
  %v607 = vpack.c.b16 %v604, %v603
  %v608 = vpack.c.b16 %v606, %v605
  %611 = vst [vmem:[#allocation2 + $0x70] sm:$0xff] %v607
  %612 = vst [vmem:[#allocation2 + $0x78] sm:$0xff] %v608
  %613 = vrot.lane.b32.xlu0 %v224, 111
  %v614 = vpop.permute.xlu0 %613
  %615 = vrot.lane.b32.xlu0 %v225, 111
  %v616 = vpop.permute.xlu0 %615
  %617 = vrot.lane.b32.xlu0 %v226, 111
  %v618 = vpop.permute.xlu0 %617
  %619 = vrot.lane.b32.xlu0 %v227, 111
  %v620 = vpop.permute.xlu0 %619
  %vm621 = vcmp.lt.s32.totalorder %v245, 111
  %v622 = vsel %vm621, %v618, %v620
  %v623 = vsel %vm621, %v616, %v618
  %v624 = vsel %vm621, %v614, %v616
  %v625 = vsel %vm621, %v620, %v614
  %v626 = vlaneseq
  %v627 = vshrl.u32 %v626, 7
  %v628 = vsub.s32 0, %v627
  %v629 = vrot.slane %v232, %v628
  %v630 = vlaneseq
  %v631 = vshrl.u32 %v630, 7
  %v632 = vsub.s32 0, %v631
  %v633 = vrot.slane %v233, %v632
  %v634 = vlaneseq
  %v635 = vshrl.u32 %v634, 7
  %v636 = vsub.s32 0, %v635
  %v637 = vrot.slane %v234, %v636
  %v638 = vlaneseq
  %v639 = vshrl.u32 %v638, 7
  %v640 = vsub.s32 0, %v639
  %v641 = vrot.slane %v235, %v640
  %v642 = vmul.f32 %v624, %v629
  %v643 = vmul.f32 %v623, %v633
  %v644 = vmul.f32 %v622, %v637
  %v645 = vmul.f32 %v625, %v641
  %v646 = vpack.c.bf16 %v642, %v642
  %v647 = vpack.c.bf16 %v643, %v643
  %v648 = vpack.c.bf16 %v644, %v644
  %v649 = vpack.c.bf16 %v645, %v645
  %v654 = vunpack.c.l.b16 %v646
  %v655 = vunpack.c.l.b16 %v647
  %v656 = vunpack.c.l.b16 %v648
  %v657 = vunpack.c.l.b16 %v649
  %v658 = vpack.c.b16 %v655, %v654
  %v659 = vpack.c.b16 %v657, %v656
  %662 = vst [vmem:[#allocation2 + $0x80] sm:$0xff] %v658
  %663 = vst [vmem:[#allocation2 + $0x88] sm:$0xff] %v659
  %v664 = vld [vmem:[%s4] sm:$0xf]
  %v665 = vld [vmem:[#allocation2] sm:$0xff]
  %v666 = vld [vmem:[#allocation2 + $0x8] sm:$0xff]
  %v667 = vld [vmem:[#allocation2 + $0x10] sm:$0xff]
  %v668 = vld [vmem:[#allocation2 + $0x18] sm:$0xff]
  %v669 = vld [vmem:[#allocation2 + $0x20] sm:$0xff]
  %v670 = vld [vmem:[#allocation2 + $0x28] sm:$0xff]
  %v671 = vld [vmem:[#allocation2 + $0x30] sm:$0xff]
  %v672 = vld [vmem:[#allocation2 + $0x38] sm:$0xff]
  %v673 = vld [vmem:[#allocation2 + $0x40] sm:$0xff]
  %v674 = vld [vmem:[#allocation2 + $0x48] sm:$0xff]
  %v675 = vld [vmem:[#allocation2 + $0x50] sm:$0xff]
  %v676 = vld [vmem:[#allocation2 + $0x58] sm:$0xff]
  %v677 = vld [vmem:[#allocation2 + $0x60] sm:$0xff]
  %v678 = vld [vmem:[#allocation2 + $0x68] sm:$0xff]
  %v679 = vld [vmem:[#allocation2 + $0x70] sm:$0xff]
  %v680 = vld [vmem:[#allocation2 + $0x78] sm:$0xff]
  %v681 = vld [vmem:[#allocation2 + $0x80] sm:$0xff]
  %v682 = vld [vmem:[#allocation2 + $0x88] sm:$0xff]
  %v701 = vunpack.c.l.b16 %v665
  %v702 = vunpack.c.h.b16 %v665
  %v703 = vunpack.c.l.b16 %v666
  %v704 = vunpack.c.h.b16 %v666
  %v705 = vunpack.c.l.b16 %v667
  %v706 = vunpack.c.h.b16 %v667
  %v707 = vunpack.c.l.b16 %v668
  %v708 = vunpack.c.h.b16 %v668
  %v709 = vunpack.c.l.b16 %v669
  %v710 = vunpack.c.h.b16 %v669
  %v711 = vunpack.c.l.b16 %v670
  %v712 = vunpack.c.h.b16 %v670
  %v713 = vunpack.c.l.b16 %v671
  %v714 = vunpack.c.h.b16 %v671
  %v715 = vunpack.c.l.b16 %v672
  %v716 = vunpack.c.h.b16 %v672
  %v717 = vunpack.c.l.b16 %v673
  %v718 = vunpack.c.h.b16 %v673
  %v719 = vunpack.c.l.b16 %v674
  %v720 = vunpack.c.h.b16 %v674
  %v721 = vunpack.c.l.b16 %v675
  %v722 = vunpack.c.h.b16 %v675
  %v723 = vunpack.c.l.b16 %v676
  %v724 = vunpack.c.h.b16 %v676
  %v725 = vunpack.c.l.b16 %v677
  %v726 = vunpack.c.h.b16 %v677
  %v727 = vunpack.c.l.b16 %v678
  %v728 = vunpack.c.h.b16 %v678
  %v729 = vunpack.c.l.b16 %v679
  %v730 = vunpack.c.h.b16 %v679
  %v731 = vunpack.c.l.b16 %v680
  %v732 = vunpack.c.h.b16 %v680
  %v733 = vunpack.c.l.b16 %v681
  %v734 = vunpack.c.h.b16 %v681
  %v735 = vunpack.c.l.b16 %v682
  %v736 = vunpack.c.h.b16 %v682
  %v737 = vpack.c.b16 %v705, %v701
  %v738 = vpack.c.b16 %v706, %v702
  %v739 = vpack.c.b16 %v707, %v703
  %v740 = vpack.c.b16 %v708, %v704
  %v741 = vpack.c.b16 %v713, %v709
  %v742 = vpack.c.b16 %v714, %v710
  %v743 = vpack.c.b16 %v715, %v711
  %v744 = vpack.c.b16 %v716, %v712
  %v745 = vpack.c.b16 %v721, %v717
  %v746 = vpack.c.b16 %v722, %v718
  %v747 = vpack.c.b16 %v723, %v719
  %v748 = vpack.c.b16 %v724, %v720
  %v749 = vpack.c.b16 %v729, %v725
  %v750 = vpack.c.b16 %v730, %v726
  %v751 = vpack.c.b16 %v731, %v727
  %v752 = vpack.c.b16 %v732, %v728
  %v753 = vpack.c.b16 %v733, %v733
  %v754 = vpack.c.b16 %v734, %v734
  %v755 = vpack.c.b16 %v735, %v735
  %v756 = vpack.c.b16 %v736, %v736
  %vm773 = vcmask 588800
  %v775 = vsel %vm773, %v664, 0
  %v778 = vsel %vm223, %v753, 0
  %v781 = vsel %vm223, %v754, 0
  %v784 = vsel %vm223, %v755, 0
  %v787 = vsel %vm223, %v756, 0
  %789 = vmatprep.subr.bf16.mxu0 %v738
  %790 = vmatpush1.bf16.msra.mxu0 %v737
  %791 = vmatprep.subr.bf16.mxu0 %v742
  %792 = vmatpush1.bf16.msra.mxu0 %v741
  %793 = vmatprep.subr.bf16.mxu0 %v746
  %794 = vmatpush1.bf16.msra.mxu0 %v745
  %795 = vmatprep.subr.bf16.mxu0 %v750
  %796 = vmatpush1.bf16.msra.mxu0 %v749
  %797 = vmatprep.subr.bf16.mxu0 %v781
  %798 = vmatpush1.bf16.msra.mxu0 %v778
  %799 = vmatprep.subr.bf16.mxu0 0
  %800 = vmatpush1.bf16.msra.mxu0 0
  %801 = vmatprep.subr.bf16.mxu0 0
  %802 = vmatpush1.bf16.msra.mxu0 0
  %803 = vmatprep.subr.bf16.mxu0 0
  %804 = vmatpush1.bf16.msra.mxu0 0
  %805 = vmatprep.subr.bf16.mxu0 0
  %806 = vmatpush1.bf16.msra.mxu0 0
  %807 = vmatprep.subr.bf16.mxu0 0
  %808 = vmatpush1.bf16.msra.mxu0 0
  %809 = vmatprep.subr.bf16.mxu0 0
  %810 = vmatpush1.bf16.msra.mxu0 0
  %811 = vmatprep.subr.bf16.mxu0 0
  %812 = vmatpush1.bf16.msra.mxu0 0
  %813 = vmatprep.subr.bf16.mxu0 0
  %814 = vmatpush1.bf16.msra.mxu0 0
  %815 = vmatprep.subr.bf16.mxu0 0
  %816 = vmatpush1.bf16.msra.mxu0 0
  %817 = vmatprep.subr.bf16.mxu0 0
  %818 = vmatpush1.bf16.msra.mxu0 0
  %819 = vmatprep.subr.bf16.mxu0 0
  %820 = vmatpush1.bf16.msra.mxu0 0
  %821 = vmatprep.mubr.bf16.mxu0 0
  %822 = vmatmul.mubr.bf16.gmra.mrb[0].mxu0 %v775
  %v823 = vpop.f32.mrb[0].mxu0
  %v824 = vadd.f32 0.0, %v823
  %v825 = vpop.f32.mrb[0].mxu0
  %v826 = vadd.f32 0.0, %v825
  %v827 = vpop.f32.mrb[0].mxu0
  %v828 = vpop.f32.mrb[0].mxu0
  %829 = vdwg.mxu0
  %830 = vmatprep.subr.bf16.mxu0 %v740
  %831 = vmatpush1.bf16.msra.mxu0 %v739
  %832 = vmatprep.subr.bf16.mxu0 %v744
  %833 = vmatpush1.bf16.msra.mxu0 %v743
  %834 = vmatprep.subr.bf16.mxu0 %v748
  %835 = vmatpush1.bf16.msra.mxu0 %v747
  %836 = vmatprep.subr.bf16.mxu0 %v752
  %837 = vmatpush1.bf16.msra.mxu0 %v751
  %838 = vmatprep.subr.bf16.mxu0 %v787
  %839 = vmatpush1.bf16.msra.mxu0 %v784
  %840 = vmatprep.subr.bf16.mxu0 0
  %841 = vmatpush1.bf16.msra.mxu0 0
  %842 = vmatprep.subr.bf16.mxu0 0
  %843 = vmatpush1.bf16.msra.mxu0 0
  %844 = vmatprep.subr.bf16.mxu0 0
  %845 = vmatpush1.bf16.msra.mxu0 0
  %846 = vmatprep.subr.bf16.mxu0 0
  %847 = vmatpush1.bf16.msra.mxu0 0
  %848 = vmatprep.subr.bf16.mxu0 0
  %849 = vmatpush1.bf16.msra.mxu0 0
  %850 = vmatprep.subr.bf16.mxu0 0
  %851 = vmatpush1.bf16.msra.mxu0 0
  %852 = vmatprep.subr.bf16.mxu0 0
  %853 = vmatpush1.bf16.msra.mxu0 0
  %854 = vmatprep.subr.bf16.mxu0 0
  %855 = vmatpush1.bf16.msra.mxu0 0
  %856 = vmatprep.subr.bf16.mxu0 0
  %857 = vmatpush1.bf16.msra.mxu0 0
  %858 = vmatprep.subr.bf16.mxu0 0
  %859 = vmatpush1.bf16.msra.mxu0 0
  %860 = vmatprep.subr.bf16.mxu0 0
  %861 = vmatpush1.bf16.msra.mxu0 0
  %862 = vmatprep.mubr.bf16.mxu0 0
  %863 = vmatmul.mubr.bf16.gmra.mrb[0].mxu0 %v775
  %v864 = vpop.f32.mrb[0].mxu0
  %v865 = vadd.f32 0.0, %v864
  %v866 = vpop.f32.mrb[0].mxu0
  %v867 = vadd.f32 0.0, %v866
  %v868 = vpop.f32.mrb[0].mxu0
  %v869 = vpop.f32.mrb[0].mxu0
  %870 = vdwg.mxu0
  %v871 = vld [vmem:[%s5] sm:$0xff]
  %v872 = vld [vmem:[%s6] sm:$0xff]
  %v873 = vmul.f32 %v824, %v824
  %v874 = vmul.f32 %v826, %v826
  %v875 = vmul.f32 %v865, %v865
  %v876 = vmul.f32 %v867, %v867
  %v877 = vadd.f32 %v824, %v826
  %v878 = vadd.f32 %v877, %v865
  %v879 = vadd.f32 %v878, %v867
  %880 = vadd.xlane.f32.xlu0 %v879
  %v881 = vpop.xlane.xlu0 %880
  %v882 = vadd.f32 %v873, %v874
  %v883 = vadd.f32 %v882, %v875
  %v884 = vadd.f32 %v883, %v876
  %885 = vadd.xlane.f32.xlu0 %v884
  %v886 = vpop.xlane.xlu0 %885
  %v887 = vmul.f32 %v881, 0.001953125
  %v888 = vmul.f32 %v886, 0.001953125
  %v889 = vmul.f32 %v887, %v887
  %v890 = vsub.f32 %v888, %v889
  %v891 = vmax.f32 %v890, 0.0
  %v892 = vadd.f32 %v891, 1e-05
  %v893 = vrsqrt.pop %v892
  %v894 = vmul.f32 %v871, %v893
  %v895 = vmul.f32 %v887, %v894
  %v896 = vsub.f32 %v872, %v895
  %898 = vset.pattern.permute.xlu0 0
  %899 = vperm.xlu0 %898, %v894
  %v900 = vpop.permute.xlu0 %899
  %v902 = vmul.f32 %v824, %v900
  %v903 = vmul.f32 %v826, %v900
  %v904 = vmul.f32 %v865, %v900
  %v905 = vmul.f32 %v867, %v900
  %907 = vset.pattern.permute.xlu0 0
  %908 = vperm.xlu0 %907, %v896
  %v909 = vpop.permute.xlu0 %908
  %v911 = vadd.f32 %v902, %v909
  %v912 = vadd.f32 %v903, %v909
  %v913 = vadd.f32 %v904, %v909
  %v914 = vadd.f32 %v905, %v909
  %v915 = vmax.f32 %v911, 0.0
  %v916 = vmax.f32 %v912, 0.0
  %v917 = vmax.f32 %v913, 0.0
  %v918 = vmax.f32 %v914, 0.0
  %919 = vrot.lane.b32.xlu0 %v915, 17
  %v920 = vpop.permute.xlu0 %919
  %921 = vrot.lane.b32.xlu0 %v916, 17
  %v922 = vpop.permute.xlu0 %921
  %923 = vrot.lane.b32.xlu0 %v917, 17
  %v924 = vpop.permute.xlu0 %923
  %925 = vrot.lane.b32.xlu0 %v918, 17
  %v926 = vpop.permute.xlu0 %925
  %v927 = vsel %vm246, %v924, %v926
  %v928 = vsel %vm246, %v922, %v924
  %v929 = vsel %vm246, %v920, %v922
  %v930 = vsel %vm246, %v926, %v920
  %v931 = vmul.f32 %v930, %v254
  %v932 = vmul.f32 %v929, %v258
  %v933 = vmul.f32 %v928, %v262
  %v934 = vmul.f32 %v927, %v266
  %v935 = vpack.c.bf16 %v931, %v931
  %v936 = vpack.c.bf16 %v932, %v932
  %v937 = vpack.c.bf16 %v933, %v933
  %v938 = vpack.c.bf16 %v934, %v934
  %v943 = vunpack.c.l.b16 %v935
  %v944 = vunpack.c.l.b16 %v936
  %v945 = vunpack.c.l.b16 %v937
  %v946 = vunpack.c.l.b16 %v938
  %v947 = vpack.c.b16 %v944, %v943
  %v948 = vpack.c.b16 %v946, %v945
  %951 = vst [vmem:[#allocation3] sm:$0xff] %v947
  %952 = vst [vmem:[#allocation3 + $0x8] sm:$0xff] %v948
  %953 = vrot.lane.b32.xlu0 %v915, 16
  %v954 = vpop.permute.xlu0 %953
  %955 = vrot.lane.b32.xlu0 %v916, 16
  %v956 = vpop.permute.xlu0 %955
  %957 = vrot.lane.b32.xlu0 %v917, 16
  %v958 = vpop.permute.xlu0 %957
  %959 = vrot.lane.b32.xlu0 %v918, 16
  %v960 = vpop.permute.xlu0 %959
  %v961 = vsel %vm297, %v958, %v960
  %v962 = vsel %vm297, %v956, %v958
  %v963 = vsel %vm297, %v954, %v956
  %v964 = vsel %vm297, %v960, %v954
  %v965 = vmul.f32 %v964, %v305
  %v966 = vmul.f32 %v963, %v309
  %v967 = vmul.f32 %v962, %v313
  %v968 = vmul.f32 %v961, %v317
  %v969 = vpack.c.bf16 %v965, %v965
  %v970 = vpack.c.bf16 %v966, %v966
  %v971 = vpack.c.bf16 %v967, %v967
  %v972 = vpack.c.bf16 %v968, %v968
  %v977 = vunpack.c.l.b16 %v969
  %v978 = vunpack.c.l.b16 %v970
  %v979 = vunpack.c.l.b16 %v971
  %v980 = vunpack.c.l.b16 %v972
  %v981 = vpack.c.b16 %v978, %v977
  %v982 = vpack.c.b16 %v980, %v979
  %985 = vst [vmem:[#allocation3 + $0x10] sm:$0xff] %v981
  %986 = vst [vmem:[#allocation3 + $0x18] sm:$0xff] %v982
  %987 = vrot.lane.b32.xlu0 %v915, 15
  %v988 = vpop.permute.xlu0 %987
  %989 = vrot.lane.b32.xlu0 %v916, 15
  %v990 = vpop.permute.xlu0 %989
  %991 = vrot.lane.b32.xlu0 %v917, 15
  %v992 = vpop.permute.xlu0 %991
  %993 = vrot.lane.b32.xlu0 %v918, 15
  %v994 = vpop.permute.xlu0 %993
  %v995 = vsel %vm348, %v992, %v994
  %v996 = vsel %vm348, %v990, %v992
  %v997 = vsel %vm348, %v988, %v990
  %v998 = vsel %vm348, %v994, %v988
  %v999 = vmul.f32 %v998, %v356
  %v1000 = vmul.f32 %v997, %v360
  %v1001 = vmul.f32 %v996, %v364
  %v1002 = vmul.f32 %v995, %v368
  %v1003 = vpack.c.bf16 %v999, %v999
  %v1004 = vpack.c.bf16 %v1000, %v1000
  %v1005 = vpack.c.bf16 %v1001, %v1001
  %v1006 = vpack.c.bf16 %v1002, %v1002
  %v1011 = vunpack.c.l.b16 %v1003
  %v1012 = vunpack.c.l.b16 %v1004
  %v1013 = vunpack.c.l.b16 %v1005
  %v1014 = vunpack.c.l.b16 %v1006
  %v1015 = vpack.c.b16 %v1012, %v1011
  %v1016 = vpack.c.b16 %v1014, %v1013
  %1019 = vst [vmem:[#allocation3 + $0x20] sm:$0xff] %v1015
  %1020 = vst [vmem:[#allocation3 + $0x28] sm:$0xff] %v1016
  %1021 = vrot.lane.b32.xlu0 %v915, 1
  %v1022 = vpop.permute.xlu0 %1021
  %1023 = vrot.lane.b32.xlu0 %v916, 1
  %v1024 = vpop.permute.xlu0 %1023
  %1025 = vrot.lane.b32.xlu0 %v917, 1
  %v1026 = vpop.permute.xlu0 %1025
  %1027 = vrot.lane.b32.xlu0 %v918, 1
  %v1028 = vpop.permute.xlu0 %1027
  %v1029 = vsel %vm399, %v1026, %v1028
  %v1030 = vsel %vm399, %v1024, %v1026
  %v1031 = vsel %vm399, %v1022, %v1024
  %v1032 = vsel %vm399, %v1028, %v1022
  %v1033 = vmul.f32 %v1032, %v407
  %v1034 = vmul.f32 %v1031, %v411
  %v1035 = vmul.f32 %v1030, %v415
  %v1036 = vmul.f32 %v1029, %v419
  %v1037 = vpack.c.bf16 %v1033, %v1033
  %v1038 = vpack.c.bf16 %v1034, %v1034
  %v1039 = vpack.c.bf16 %v1035, %v1035
  %v1040 = vpack.c.bf16 %v1036, %v1036
  %v1045 = vunpack.c.l.b16 %v1037
  %v1046 = vunpack.c.l.b16 %v1038
  %v1047 = vunpack.c.l.b16 %v1039
  %v1048 = vunpack.c.l.b16 %v1040
  %v1049 = vpack.c.b16 %v1046, %v1045
  %v1050 = vpack.c.b16 %v1048, %v1047
  %1053 = vst [vmem:[#allocation3 + $0x30] sm:$0xff] %v1049
  %1054 = vst [vmem:[#allocation3 + $0x38] sm:$0xff] %v1050
  %v1055 = vpack.c.bf16 %v915, %v915
  %v1056 = vpack.c.bf16 %v916, %v916
  %v1057 = vpack.c.bf16 %v917, %v917
  %v1058 = vpack.c.bf16 %v918, %v918
  %v1063 = vunpack.c.l.b16 %v1055
  %v1064 = vunpack.c.l.b16 %v1056
  %v1065 = vunpack.c.l.b16 %v1057
  %v1066 = vunpack.c.l.b16 %v1058
  %v1067 = vpack.c.b16 %v1064, %v1063
  %v1068 = vpack.c.b16 %v1066, %v1065
  %1071 = vst [vmem:[#allocation3 + $0x40] sm:$0xff] %v1067
  %1072 = vst [vmem:[#allocation3 + $0x48] sm:$0xff] %v1068
  %1073 = vrot.lane.b32.xlu0 %v915, 127
  %v1074 = vpop.permute.xlu0 %1073
  %1075 = vrot.lane.b32.xlu0 %v916, 127
  %v1076 = vpop.permute.xlu0 %1075
  %1077 = vrot.lane.b32.xlu0 %v917, 127
  %v1078 = vpop.permute.xlu0 %1077
  %1079 = vrot.lane.b32.xlu0 %v918, 127
  %v1080 = vpop.permute.xlu0 %1079
  %v1081 = vsel %vm468, %v1078, %v1080
  %v1082 = vsel %vm468, %v1076, %v1078
  %v1083 = vsel %vm468, %v1074, %v1076
  %v1084 = vsel %vm468, %v1080, %v1074
  %v1085 = vmul.f32 %v1083, %v476
  %v1086 = vmul.f32 %v1082, %v480
  %v1087 = vmul.f32 %v1081, %v484
  %v1088 = vmul.f32 %v1084, %v488
  %v1089 = vpack.c.bf16 %v1085, %v1085
  %v1090 = vpack.c.bf16 %v1086, %v1086
  %v1091 = vpack.c.bf16 %v1087, %v1087
  %v1092 = vpack.c.bf16 %v1088, %v1088
  %v1097 = vunpack.c.l.b16 %v1089
  %v1098 = vunpack.c.l.b16 %v1090
  %v1099 = vunpack.c.l.b16 %v1091
  %v1100 = vunpack.c.l.b16 %v1092
  %v1101 = vpack.c.b16 %v1098, %v1097
  %v1102 = vpack.c.b16 %v1100, %v1099
  %1105 = vst [vmem:[#allocation3 + $0x50] sm:$0xff] %v1101
  %1106 = vst [vmem:[#allocation3 + $0x58] sm:$0xff] %v1102
  %1107 = vrot.lane.b32.xlu0 %v915, 113
  %v1108 = vpop.permute.xlu0 %1107
  %1109 = vrot.lane.b32.xlu0 %v916, 113
  %v1110 = vpop.permute.xlu0 %1109
  %1111 = vrot.lane.b32.xlu0 %v917, 113
  %v1112 = vpop.permute.xlu0 %1111
  %1113 = vrot.lane.b32.xlu0 %v918, 113
  %v1114 = vpop.permute.xlu0 %1113
  %v1115 = vsel %vm519, %v1112, %v1114
  %v1116 = vsel %vm519, %v1110, %v1112
  %v1117 = vsel %vm519, %v1108, %v1110
  %v1118 = vsel %vm519, %v1114, %v1108
  %v1119 = vmul.f32 %v1117, %v527
  %v1120 = vmul.f32 %v1116, %v531
  %v1121 = vmul.f32 %v1115, %v535
  %v1122 = vmul.f32 %v1118, %v539
  %v1123 = vpack.c.bf16 %v1119, %v1119
  %v1124 = vpack.c.bf16 %v1120, %v1120
  %v1125 = vpack.c.bf16 %v1121, %v1121
  %v1126 = vpack.c.bf16 %v1122, %v1122
  %v1131 = vunpack.c.l.b16 %v1123
  %v1132 = vunpack.c.l.b16 %v1124
  %v1133 = vunpack.c.l.b16 %v1125
  %v1134 = vunpack.c.l.b16 %v1126
  %v1135 = vpack.c.b16 %v1132, %v1131
  %v1136 = vpack.c.b16 %v1134, %v1133
  %1139 = vst [vmem:[#allocation3 + $0x60] sm:$0xff] %v1135
  %1140 = vst [vmem:[#allocation3 + $0x68] sm:$0xff] %v1136
  %1141 = vrot.lane.b32.xlu0 %v915, 112
  %v1142 = vpop.permute.xlu0 %1141
  %1143 = vrot.lane.b32.xlu0 %v916, 112
  %v1144 = vpop.permute.xlu0 %1143
  %1145 = vrot.lane.b32.xlu0 %v917, 112
  %v1146 = vpop.permute.xlu0 %1145
  %1147 = vrot.lane.b32.xlu0 %v918, 112
  %v1148 = vpop.permute.xlu0 %1147
  %v1149 = vsel %vm570, %v1146, %v1148
  %v1150 = vsel %vm570, %v1144, %v1146
  %v1151 = vsel %vm570, %v1142, %v1144
  %v1152 = vsel %vm570, %v1148, %v1142
  %v1153 = vmul.f32 %v1151, %v578
  %v1154 = vmul.f32 %v1150, %v582
  %v1155 = vmul.f32 %v1149, %v586
  %v1156 = vmul.f32 %v1152, %v590
  %v1157 = vpack.c.bf16 %v1153, %v1153
  %v1158 = vpack.c.bf16 %v1154, %v1154
  %v1159 = vpack.c.bf16 %v1155, %v1155
  %v1160 = vpack.c.bf16 %v1156, %v1156
  %v1165 = vunpack.c.l.b16 %v1157
  %v1166 = vunpack.c.l.b16 %v1158
  %v1167 = vunpack.c.l.b16 %v1159
  %v1168 = vunpack.c.l.b16 %v1160
  %v1169 = vpack.c.b16 %v1166, %v1165
  %v1170 = vpack.c.b16 %v1168, %v1167
  %1173 = vst [vmem:[#allocation3 + $0x70] sm:$0xff] %v1169
  %1174 = vst [vmem:[#allocation3 + $0x78] sm:$0xff] %v1170
  %1175 = vrot.lane.b32.xlu0 %v915, 111
  %v1176 = vpop.permute.xlu0 %1175
  %1177 = vrot.lane.b32.xlu0 %v916, 111
  %v1178 = vpop.permute.xlu0 %1177
  %1179 = vrot.lane.b32.xlu0 %v917, 111
  %v1180 = vpop.permute.xlu0 %1179
  %1181 = vrot.lane.b32.xlu0 %v918, 111
  %v1182 = vpop.permute.xlu0 %1181
  %v1183 = vsel %vm621, %v1180, %v1182
  %v1184 = vsel %vm621, %v1178, %v1180
  %v1185 = vsel %vm621, %v1176, %v1178
  %v1186 = vsel %vm621, %v1182, %v1176
  %v1187 = vmul.f32 %v1185, %v629
  %v1188 = vmul.f32 %v1184, %v633
  %v1189 = vmul.f32 %v1183, %v637
  %v1190 = vmul.f32 %v1186, %v641
  %v1191 = vpack.c.bf16 %v1187, %v1187
  %v1192 = vpack.c.bf16 %v1188, %v1188
  %v1193 = vpack.c.bf16 %v1189, %v1189
  %v1194 = vpack.c.bf16 %v1190, %v1190
  %v1199 = vunpack.c.l.b16 %v1191
  %v1200 = vunpack.c.l.b16 %v1192
  %v1201 = vunpack.c.l.b16 %v1193
  %v1202 = vunpack.c.l.b16 %v1194
  %v1203 = vpack.c.b16 %v1200, %v1199
  %v1204 = vpack.c.b16 %v1202, %v1201
  %1207 = vst [vmem:[#allocation3 + $0x80] sm:$0xff] %v1203
  %1208 = vst [vmem:[#allocation3 + $0x88] sm:$0xff] %v1204
  %v1209 = vld [vmem:[%s7] sm:$0xf]
  %v1210 = vld [vmem:[#allocation3] sm:$0xff]
  %v1211 = vld [vmem:[#allocation3 + $0x8] sm:$0xff]
  %v1212 = vld [vmem:[#allocation3 + $0x10] sm:$0xff]
  %v1213 = vld [vmem:[#allocation3 + $0x18] sm:$0xff]
  %v1214 = vld [vmem:[#allocation3 + $0x20] sm:$0xff]
  %v1215 = vld [vmem:[#allocation3 + $0x28] sm:$0xff]
  %v1216 = vld [vmem:[#allocation3 + $0x30] sm:$0xff]
  %v1217 = vld [vmem:[#allocation3 + $0x38] sm:$0xff]
  %v1218 = vld [vmem:[#allocation3 + $0x40] sm:$0xff]
  %v1219 = vld [vmem:[#allocation3 + $0x48] sm:$0xff]
  %v1220 = vld [vmem:[#allocation3 + $0x50] sm:$0xff]
  %v1221 = vld [vmem:[#allocation3 + $0x58] sm:$0xff]
  %v1222 = vld [vmem:[#allocation3 + $0x60] sm:$0xff]
  %v1223 = vld [vmem:[#allocation3 + $0x68] sm:$0xff]
  %v1224 = vld [vmem:[#allocation3 + $0x70] sm:$0xff]
  %v1225 = vld [vmem:[#allocation3 + $0x78] sm:$0xff]
  %v1226 = vld [vmem:[#allocation3 + $0x80] sm:$0xff]
  %v1227 = vld [vmem:[#allocation3 + $0x88] sm:$0xff]
  %v1246 = vunpack.c.l.b16 %v1210
  %v1247 = vunpack.c.h.b16 %v1210
  %v1248 = vunpack.c.l.b16 %v1211
  %v1249 = vunpack.c.h.b16 %v1211
  %v1250 = vunpack.c.l.b16 %v1212
  %v1251 = vunpack.c.h.b16 %v1212
  %v1252 = vunpack.c.l.b16 %v1213
  %v1253 = vunpack.c.h.b16 %v1213
  %v1254 = vunpack.c.l.b16 %v1214
  %v1255 = vunpack.c.h.b16 %v1214
  %v1256 = vunpack.c.l.b16 %v1215
  %v1257 = vunpack.c.h.b16 %v1215
  %v1258 = vunpack.c.l.b16 %v1216
  %v1259 = vunpack.c.h.b16 %v1216
  %v1260 = vunpack.c.l.b16 %v1217
  %v1261 = vunpack.c.h.b16 %v1217
  %v1262 = vunpack.c.l.b16 %v1218
  %v1263 = vunpack.c.h.b16 %v1218
  %v1264 = vunpack.c.l.b16 %v1219
  %v1265 = vunpack.c.h.b16 %v1219
  %v1266 = vunpack.c.l.b16 %v1220
  %v1267 = vunpack.c.h.b16 %v1220
  %v1268 = vunpack.c.l.b16 %v1221
  %v1269 = vunpack.c.h.b16 %v1221
  %v1270 = vunpack.c.l.b16 %v1222
  %v1271 = vunpack.c.h.b16 %v1222
  %v1272 = vunpack.c.l.b16 %v1223
  %v1273 = vunpack.c.h.b16 %v1223
  %v1274 = vunpack.c.l.b16 %v1224
  %v1275 = vunpack.c.h.b16 %v1224
  %v1276 = vunpack.c.l.b16 %v1225
  %v1277 = vunpack.c.h.b16 %v1225
  %v1278 = vunpack.c.l.b16 %v1226
  %v1279 = vunpack.c.h.b16 %v1226
  %v1280 = vunpack.c.l.b16 %v1227
  %v1281 = vunpack.c.h.b16 %v1227
  %v1282 = vpack.c.b16 %v1250, %v1246
  %v1283 = vpack.c.b16 %v1251, %v1247
  %v1284 = vpack.c.b16 %v1252, %v1248
  %v1285 = vpack.c.b16 %v1253, %v1249
  %v1286 = vpack.c.b16 %v1258, %v1254
  %v1287 = vpack.c.b16 %v1259, %v1255
  %v1288 = vpack.c.b16 %v1260, %v1256
  %v1289 = vpack.c.b16 %v1261, %v1257
  %v1290 = vpack.c.b16 %v1266, %v1262
  %v1291 = vpack.c.b16 %v1267, %v1263
  %v1292 = vpack.c.b16 %v1268, %v1264
  %v1293 = vpack.c.b16 %v1269, %v1265
  %v1294 = vpack.c.b16 %v1274, %v1270
  %v1295 = vpack.c.b16 %v1275, %v1271
  %v1296 = vpack.c.b16 %v1276, %v1272
  %v1297 = vpack.c.b16 %v1277, %v1273
  %v1298 = vpack.c.b16 %v1278, %v1278
  %v1299 = vpack.c.b16 %v1279, %v1279
  %v1300 = vpack.c.b16 %v1280, %v1280
  %v1301 = vpack.c.b16 %v1281, %v1281
  %v1319 = vsel %vm773, %v1209, 0
  %v1322 = vsel %vm223, %v1298, 0
  %v1325 = vsel %vm223, %v1299, 0
  %v1328 = vsel %vm223, %v1300, 0
  %v1331 = vsel %vm223, %v1301, 0
  %1333 = vmatprep.subr.bf16.mxu0 %v1283
  %1334 = vmatpush1.bf16.msra.mxu0 %v1282
  %1335 = vmatprep.subr.bf16.mxu0 %v1287
  %1336 = vmatpush1.bf16.msra.mxu0 %v1286
  %1337 = vmatprep.subr.bf16.mxu0 %v1291
  %1338 = vmatpush1.bf16.msra.mxu0 %v1290
  %1339 = vmatprep.subr.bf16.mxu0 %v1295
  %1340 = vmatpush1.bf16.msra.mxu0 %v1294
  %1341 = vmatprep.subr.bf16.mxu0 %v1325
  %1342 = vmatpush1.bf16.msra.mxu0 %v1322
  %1343 = vmatprep.subr.bf16.mxu0 0
  %1344 = vmatpush1.bf16.msra.mxu0 0
  %1345 = vmatprep.subr.bf16.mxu0 0
  %1346 = vmatpush1.bf16.msra.mxu0 0
  %1347 = vmatprep.subr.bf16.mxu0 0
  %1348 = vmatpush1.bf16.msra.mxu0 0
  %1349 = vmatprep.subr.bf16.mxu0 0
  %1350 = vmatpush1.bf16.msra.mxu0 0
  %1351 = vmatprep.subr.bf16.mxu0 0
  %1352 = vmatpush1.bf16.msra.mxu0 0
  %1353 = vmatprep.subr.bf16.mxu0 0
  %1354 = vmatpush1.bf16.msra.mxu0 0
  %1355 = vmatprep.subr.bf16.mxu0 0
  %1356 = vmatpush1.bf16.msra.mxu0 0
  %1357 = vmatprep.subr.bf16.mxu0 0
  %1358 = vmatpush1.bf16.msra.mxu0 0
  %1359 = vmatprep.subr.bf16.mxu0 0
  %1360 = vmatpush1.bf16.msra.mxu0 0
  %1361 = vmatprep.subr.bf16.mxu0 0
  %1362 = vmatpush1.bf16.msra.mxu0 0
  %1363 = vmatprep.subr.bf16.mxu0 0
  %1364 = vmatpush1.bf16.msra.mxu0 0
  %1365 = vmatprep.mubr.bf16.mxu0 0
  %1366 = vmatmul.mubr.bf16.gmra.mrb[0].mxu0 %v1319
  %v1367 = vpop.f32.mrb[0].mxu0
  %v1368 = vadd.f32 0.0, %v1367
  %v1369 = vpop.f32.mrb[0].mxu0
  %v1370 = vadd.f32 0.0, %v1369
  %v1371 = vpop.f32.mrb[0].mxu0
  %v1372 = vpop.f32.mrb[0].mxu0
  %1373 = vdwg.mxu0
  %1374 = vmatprep.subr.bf16.mxu0 %v1285
  %1375 = vmatpush1.bf16.msra.mxu0 %v1284
  %1376 = vmatprep.subr.bf16.mxu0 %v1289
  %1377 = vmatpush1.bf16.msra.mxu0 %v1288
  %1378 = vmatprep.subr.bf16.mxu0 %v1293
  %1379 = vmatpush1.bf16.msra.mxu0 %v1292
  %1380 = vmatprep.subr.bf16.mxu0 %v1297
  %1381 = vmatpush1.bf16.msra.mxu0 %v1296
  %1382 = vmatprep.subr.bf16.mxu0 %v1331
  %1383 = vmatpush1.bf16.msra.mxu0 %v1328
  %1384 = vmatprep.subr.bf16.mxu0 0
  %1385 = vmatpush1.bf16.msra.mxu0 0
  %1386 = vmatprep.subr.bf16.mxu0 0
  %1387 = vmatpush1.bf16.msra.mxu0 0
  %1388 = vmatprep.subr.bf16.mxu0 0
  %1389 = vmatpush1.bf16.msra.mxu0 0
  %1390 = vmatprep.subr.bf16.mxu0 0
  %1391 = vmatpush1.bf16.msra.mxu0 0
  %1392 = vmatprep.subr.bf16.mxu0 0
  %1393 = vmatpush1.bf16.msra.mxu0 0
  %1394 = vmatprep.subr.bf16.mxu0 0
  %1395 = vmatpush1.bf16.msra.mxu0 0
  %1396 = vmatprep.subr.bf16.mxu0 0
  %1397 = vmatpush1.bf16.msra.mxu0 0
  %1398 = vmatprep.subr.bf16.mxu0 0
  %1399 = vmatpush1.bf16.msra.mxu0 0
  %1400 = vmatprep.subr.bf16.mxu0 0
  %1401 = vmatpush1.bf16.msra.mxu0 0
  %1402 = vmatprep.subr.bf16.mxu0 0
  %1403 = vmatpush1.bf16.msra.mxu0 0
  %1404 = vmatprep.subr.bf16.mxu0 0
  %1405 = vmatpush1.bf16.msra.mxu0 0
  %1406 = vmatprep.mubr.bf16.mxu0 0
  %1407 = vmatmul.mubr.bf16.gmra.mrb[0].mxu0 %v1319
  %v1408 = vpop.f32.mrb[0].mxu0
  %v1409 = vadd.f32 0.0, %v1408
  %v1410 = vpop.f32.mrb[0].mxu0
  %v1411 = vadd.f32 0.0, %v1410
  %v1412 = vpop.f32.mrb[0].mxu0
  %v1413 = vpop.f32.mrb[0].mxu0
  %1414 = vdwg.mxu0
  %v1415 = vld [vmem:[%s8] sm:$0xff]
  %v1416 = vld [vmem:[%s9] sm:$0xff]
  %v1417 = vmul.f32 %v1368, %v1368
  %v1418 = vmul.f32 %v1370, %v1370
  %v1419 = vmul.f32 %v1409, %v1409
  %v1420 = vmul.f32 %v1411, %v1411
  %v1421 = vadd.f32 %v1368, %v1370
  %v1422 = vadd.f32 %v1421, %v1409
  %v1423 = vadd.f32 %v1422, %v1411
  %1424 = vadd.xlane.f32.xlu0 %v1423
  %v1425 = vpop.xlane.xlu0 %1424
  %v1426 = vadd.f32 %v1417, %v1418
  %v1427 = vadd.f32 %v1426, %v1419
  %v1428 = vadd.f32 %v1427, %v1420
  %1429 = vadd.xlane.f32.xlu0 %v1428
  %v1430 = vpop.xlane.xlu0 %1429
  %v1431 = vmul.f32 %v1425, 0.001953125
  %v1432 = vmul.f32 %v1430, 0.001953125
  %v1433 = vmul.f32 %v1431, %v1431
  %v1434 = vsub.f32 %v1432, %v1433
  %v1435 = vmax.f32 %v1434, 0.0
  %v1436 = vadd.f32 %v1435, 1e-05
  %v1437 = vrsqrt.pop %v1436
  %v1438 = vmul.f32 %v1415, %v1437
  %v1439 = vmul.f32 %v1431, %v1438
  %v1440 = vsub.f32 %v1416, %v1439
  %1442 = vset.pattern.permute.xlu0 0
  %1443 = vperm.xlu0 %1442, %v1438
  %v1444 = vpop.permute.xlu0 %1443
  %v1446 = vmul.f32 %v1368, %v1444
  %v1447 = vmul.f32 %v1370, %v1444
  %v1448 = vmul.f32 %v1409, %v1444
  %v1449 = vmul.f32 %v1411, %v1444
  %1451 = vset.pattern.permute.xlu0 0
  %1452 = vperm.xlu0 %1451, %v1440
  %v1453 = vpop.permute.xlu0 %1452
  %v1455 = vadd.f32 %v1446, %v1453
  %v1456 = vadd.f32 %v1447, %v1453
  %v1457 = vadd.f32 %v1448, %v1453
  %v1458 = vadd.f32 %v1449, %v1453
  %v1459 = vmax.f32 %v1455, 0.0
  %v1460 = vmax.f32 %v1456, 0.0
  %v1461 = vmax.f32 %v1457, 0.0
  %v1462 = vmax.f32 %v1458, 0.0
  %1463 = vst [vmem:[%s10] sm:$0xff] %v1459
  %1464 = vst [vmem:[%s10 + $0x8] sm:$0xff] %v1460
  %1465 = vst [vmem:[%s10 + $0x10] sm:$0xff] %v1461
  %1466 = vst [vmem:[%s10 + $0x18] sm:$0xff] %v1462
  // Predicated region
  $region42: #{up_forward.1} parent=0 // pred_check
    _
  $region43: #{up_forward.1} parent=0 // pred_check_branch
    %1468 = sbr.rel (0) target = $region45
  $region44: #{up_forward.1} parent=0 // pred_region
    _
  $region45: #{up_forward.1} parent=0 // pred_fallthru
    _
  // Predicated region
  $region46: #{up_forward.1} parent=0 // pred_check
    _
  $region47: #{up_forward.1} parent=0 // pred_check_branch
    %1470 = sbr.rel (0) target = $region49
  $region48: #{up_forward.1} parent=0 // pred_region
    _
  $region49: #{up_forward.1} parent=0 // pred_fallthru
    _

</llo_original>
